<compile_context>
chip_gen: v6e
topology: v6e:2x2x1
jax: 0.10.0
libtpu: 0.0.40
codegen_flags: <defaults>
</compile_context>

<pallas_src>
import functools

import jax
import jax.numpy as jnp
from jax import lax
from jax.experimental import pallas as pl
from jax.experimental.pallas import tpu as pltpu


def _fwarp_kernel(coord_ref, src_ref, w_ref, out_ref, acc_ref, *,
                  H, W, C, tile_t, tile_s, bilinear, pad_s):
    """One (batch, target-tile, source-tile) grid step of the forward splat."""
    HW = H * W
    t_idx = pl.program_id(1)
    s_idx = pl.program_id(2)

    @pl.when(s_idx == 0)
    def _():
        acc_ref[...] = jnp.zeros_like(acc_ref)

    crd = coord_ref[0].astype(jnp.float32)      # (2, tile_s): absolute x / y coords
    src = src_ref[0].astype(jnp.float32)        # (C, tile_s)
    wgt = w_ref[0].astype(jnp.float32)          # (C, tile_s)
    xx = crd[0:1, :]
    yy = crd[1:2, :]

    if pad_s:
        # mask the ragged tail of the last source tile (padded HBM reads)
        s_local = lax.broadcasted_iota(jnp.int32, (1, tile_s), 1)
        src_valid = (s_idx * tile_s + s_local) < HW
        xx = jnp.where(src_valid, xx, -2.0)     # off-frame -> every corner masked out
        yy = jnp.where(src_valid, yy, -2.0)
        src = jnp.where(src_valid, src, 0.0)
        wgt = jnp.where(src_valid, wgt, 0.0)

    xxF = jnp.floor(xx)
    yyF = jnp.floor(yy)
    alpha = xx - xxF
    beta = yy - yyF

    src_w = src * wgt                                    # srcTensor * weight
    base = jnp.concatenate([src_w, wgt], axis=0)         # (2C, tile_s) img/norm stack

    if bilinear:
        corners = (
            (0.0, 0.0, (1.0 - alpha) * (1.0 - beta)),    # lt
            (1.0, 0.0, alpha * (1.0 - beta)),            # rt
            (0.0, 1.0, (1.0 - alpha) * beta),            # lb
            (1.0, 1.0, alpha * beta),                    # rb
        )
    else:
        ones = jnp.ones_like(alpha)
        corners = ((0.0, 0.0, ones), (1.0, 0.0, ones),
                   (0.0, 1.0, ones), (1.0, 1.0, ones))

    vals = []
    flats = []
    for dx, dy, cw in corners:
        cx = xxF + dx
        cy = yyF + dy
        inb = (cx >= 0.0) & (cx < float(W)) & (cy >= 0.0) & (cy < float(H))
        # out-of-bounds source pixels get flat index -1, which never matches a target
        flat = jnp.where(inb, cy * float(W) + cx, -1.0).astype(jnp.int32)  # (1, tile_s)
        vals.append(base * cw)                  # (2C, tile_s)
        flats.append(flat)

    v_all = jnp.concatenate(vals, axis=1)       # (2C, 4*tile_s)
    flat_all = jnp.concatenate(flats, axis=1)   # (1,  4*tile_s)

    # one-hot scatter matrix for this (target-tile, source-tile) pair
    tgt_iota = t_idx * tile_t + lax.broadcasted_iota(
        jnp.int32, (tile_t, 4 * tile_s), 0)
    m_all = (tgt_iota == flat_all).astype(jnp.float32)   # (tile_t, 4*tile_s)

    # scatter-add == one wide-K matmul against the one-hot block (contract source axis)
    acc_ref[...] += lax.dot_general(
        v_all, m_all, (((1,), (1,)), ((), ())),
        preferred_element_type=jnp.float32)              # (2C, tile_t)

    @pl.when(s_idx == pl.num_programs(2) - 1)
    def _():
        acc = acc_ref[...]
        img = acc[:C, :]
        scl = acc[C:, :]
        nonzero = scl != 0.0
        inv = pl.reciprocal(jnp.where(nonzero, scl, 1.0))   # exact: keeps 1e-4 tol
        out_ref[0] = jnp.where(nonzero, img * inv, 0.0)


def _pick_tile(hw, max_tile):
    """Largest tile <= max_tile that is either == hw or a 128-multiple dividing hw."""
    if hw <= max_tile:
        return hw
    t = (max_tile // 128) * 128
    while t >= 128:
        if hw % t == 0:
            return t
        t -= 128
    return (max_tile // 128) * 128   # padded tail; kernel masks it (pad_s=True)


def forward_warp(src, flow, weight=None, *, bilinear=True,
                 max_tile_t=512, max_tile_s=256):
    """Pallas forward-warp (splatting), semantics of torch forwadWarp.forward."""
    N, C, H, W = src.shape
    assert flow.shape == (N, 2, H, W)
    if weight is None:
        weight = jnp.ones_like(src)
    HW = H * W

    tile_t = _pick_tile(HW, max_tile_t)
    tile_s = _pick_tile(HW, max_tile_s)
    n_t = pl.cdiv(HW, tile_t)
    n_s = pl.cdiv(HW, tile_s)

    # absolute splat coordinates = pixel grid + flow (removes in-kernel % and //)
    xg = jnp.broadcast_to(jnp.arange(W, dtype=jnp.float32)[None, :], (H, W))
    yg = jnp.broadcast_to(jnp.arange(H, dtype=jnp.float32)[:, None], (H, W))
    grid_xy = jnp.stack([xg, yg], axis=0).reshape(1, 2, HW)
    coords = flow.reshape(N, 2, HW).astype(jnp.float32) + grid_xy

    # keep src/weight in their storage dtype through the DMA; cast inside the kernel
    src2 = src.reshape(N, C, HW)
    w2 = weight.reshape(N, C, HW)

    kernel = functools.partial(
        _fwarp_kernel, H=H, W=W, C=C, tile_t=tile_t, tile_s=tile_s,
        bilinear=bilinear, pad_s=(HW % tile_s != 0))

    out = pl.pallas_call(
        kernel,
        out_shape=jax.ShapeDtypeStruct((N, C, HW), jnp.float32),
        grid_spec=pltpu.PrefetchScalarGridSpec(
            num_scalar_prefetch=0,
            grid=(N, n_t, n_s),
            in_specs=[
                pl.BlockSpec((1, 2, tile_s), lambda n, t, s: (n, 0, s)),
                pl.BlockSpec((1, C, tile_s), lambda n, t, s: (n, 0, s)),
                pl.BlockSpec((1, C, tile_s), lambda n, t, s: (n, 0, s)),
            ],
            out_specs=pl.BlockSpec((1, C, tile_t), lambda n, t, s: (n, 0, t)),
            scratch_shapes=[pltpu.VMEM((2 * C, tile_t), jnp.float32)],
        ),
        compiler_params=pltpu.CompilerParams(
            dimension_semantics=("parallel", "parallel", "arbitrary"),
            vmem_limit_bytes=32 * 1024 * 1024),
    )(coords, src2, w2)

    return out.reshape(N, C, H, W).astype(src.dtype)


def _reference_forward_warp(src, flow, weight, bilinear=True):
    """Pure-JAX reference using scatter-add (.at[].add), mirrors the torch code."""
    N, C, H, W = src.shape
    HW = H * W
    xg = jnp.arange(W, dtype=jnp.float32)[None, None, None, :]
    yg = jnp.arange(H, dtype=jnp.float32)[None, None, :, None]
    xx = xg + flow[:, 0:1]            # (N,1,H,W)
    yy = yg + flow[:, 1:2]
    xxF = jnp.floor(xx)
    yyF = jnp.floor(yy)
    a = xx - xxF
    b = yy - yyF
    src_w = src * weight

    if bilinear:
        corners = ((0.0, 0.0, (1 - a) * (1 - b)), (1.0, 0.0, a * (1 - b)),
                   (0.0, 1.0, (1 - a) * b), (1.0, 1.0, a * b))
    else:
        ones = jnp.ones_like(a)
        corners = ((0.0, 0.0, ones), (1.0, 0.0, ones),
                   (0.0, 1.0, ones), (1.0, 1.0, ones))

    def scatter_1d(idx, val):
        return jnp.zeros((HW,), jnp.float32).at[idx].add(val)

    scatter = jax.vmap(jax.vmap(scatter_1d))

    tgt = jnp.zeros((N, C, HW), jnp.float32)
    scl = jnp.zeros((N, C, HW), jnp.float32)
    for dx, dy, cw in corners:
        cx = xxF + dx
        cy = yyF + dy
        mask = (cx >= 0) & (cx < W) & (cy >= 0) & (cy < H)       # (N,1,H,W)
        flat = jnp.where(mask, (cy * W + cx), 0.0).astype(jnp.int32)
        maskf = mask.astype(jnp.float32)
        img = (src_w * cw * maskf).reshape(N, C, HW)
        nrm = (weight * cw * maskf).reshape(N, C, HW)
        flatb = jnp.broadcast_to(flat, (N, C, H, W)).reshape(N, C, HW)
        tgt = tgt + scatter(flatb, img)
        scl = scl + scatter(flatb, nrm)

    nonzero = scl != 0
    out = jnp.where(nonzero, tgt / jnp.where(nonzero, scl, 1.0), 0.0)
    return out.reshape(N, C, H, W)


if __name__ == "__main__":
    key = jax.random.PRNGKey(0)
    k1, k2, k3 = jax.random.split(key, 3)

    # small case (single tile per axis)
    N, C, H, W = 2, 4, 16, 16
    src = jax.random.normal(k1, (N, C, H, W), dtype=jnp.float32)
    flow = jax.random.uniform(k2, (N, 2, H, W), minval=-4.0, maxval=4.0,
                              dtype=jnp.float32)
    weight = jax.random.uniform(k3, (N, C, H, W), minval=0.5, maxval=1.5,
                                dtype=jnp.float32)

    out = jax.block_until_ready(forward_warp(src, flow, weight, bilinear=True))
    ref = jax.block_until_ready(_reference_forward_warp(src, flow, weight, True))
    assert out.shape == (N, C, H, W)
    assert jnp.allclose(out, ref, atol=1e-4, rtol=1e-4), (
        f"max abs err = {jnp.max(jnp.abs(out - ref))}")

    # default-weight + non-bilinear path
    out2 = jax.block_until_ready(forward_warp(src, flow, None, bilinear=False))
    ref2 = _reference_forward_warp(src, flow, jnp.ones_like(src), False)
    assert jnp.allclose(out2, ref2, atol=1e-4, rtol=1e-4)

    # larger case exercising target tiling + multi-source-tile reduction
    H2, W2 = 32, 32
    s2 = jax.random.normal(k1, (N, C, H2, W2), dtype=jnp.float32)
    f2 = jax.random.uniform(k2, (N, 2, H2, W2), minval=-6.0, maxval=6.0,
                            dtype=jnp.float32)
    w2 = jax.random.uniform(k3, (N, C, H2, W2), minval=0.5, maxval=1.5,
                            dtype=jnp.float32)
    o2 = jax.block_until_ready(forward_warp(s2, f2, w2, bilinear=True))
    r2 = jax.block_until_ready(_reference_forward_warp(s2, f2, w2, True))
    assert jnp.allclose(o2, r2, atol=1e-4, rtol=1e-4), (
        f"max abs err = {jnp.max(jnp.abs(o2 - r2))}")

    # ragged case (HW not a multiple of 128) exercising the padded source-tile mask
    H3, W3 = 12, 40
    s3 = jax.random.normal(k1, (N, C, H3, W3), dtype=jnp.float32)
    f3 = jax.random.uniform(k2, (N, 2, H3, W3), minval=-3.0, maxval=3.0,
                            dtype=jnp.float32)
    o3 = jax.block_until_ready(forward_warp(s3, f3, None, bilinear=True))
    r3 = jax.block_until_ready(
        _reference_forward_warp(s3, f3, jnp.ones_like(s3), True))
    assert jnp.allclose(o3, r3, atol=1e-4, rtol=1e-4), (
        f"max abs err = {jnp.max(jnp.abs(o3 - r3))}")

    print("KERNEL_OK")
</pallas_src>

<mosaic_0001>
module attributes {stable_mosaic.version = 11 : i64} {
  func.func @_fwarp_kernel(%arg0: i32, %arg1: i32, %arg2: i32, %arg3: memref<1x2x256xf32, #tpu.memory_space<vmem>>, %arg4: memref<1x4x256xf32, #tpu.memory_space<vmem>>, %arg5: memref<1x4x256xf32, #tpu.memory_space<vmem>>, %arg6: memref<1x4x256xf32, #tpu.memory_space<vmem>>, %arg7: memref<8x256xf32, #tpu.memory_space<vmem>>) attributes {dimension_semantics = [#tpu.dimension_semantics<parallel>, #tpu.dimension_semantics<parallel>, #tpu.dimension_semantics<arbitrary>], iteration_bounds = array<i64: 2, 1, 1>, scalar_prefetch = 0 : i64, scratch_operands = 1 : i64, tpu.core_type = #tpu.core_type<tc>, window_params = [{transform_indices = @transform_0, window_bounds = array<i64: 1, 2, 256>}, {transform_indices = @transform_1, window_bounds = array<i64: 1, 4, 256>}, {transform_indices = @transform_2, window_bounds = array<i64: 1, 4, 256>}, {transform_indices = @transform_3, window_bounds = array<i64: 1, 4, 256>}]} {
    %c0_i32 = arith.constant 0 : i32
    %0 = arith.cmpi eq, %arg2, %c0_i32 : i32
    %1 = arith.extui %0 : i1 to i32
    %c0_i32_0 = arith.constant 0 : i32
    %2 = arith.cmpi ne, %1, %c0_i32_0 : i32
    scf.if %2 {
      %cst_51 = arith.constant 0.000000e+00 : f32
      %138 = vector.broadcast %cst_51 : f32 to vector<8x256xf32>
      %c0_52 = arith.constant 0 : index
      %c0_53 = arith.constant 0 : index
      %139 = vector.load %arg7[%c0_52, %c0_53] : memref<8x256xf32, #tpu.memory_space<vmem>>, vector<8x256xf32>
      tpu.vector_store %arg7[%c0_52, %c0_53], %138 {strides = array<i32>} : memref<8x256xf32, #tpu.memory_space<vmem>>, vector<8x256xf32>,
    } else {
    }
    %c0 = arith.constant 0 : index
    %c0_1 = arith.constant 0 : index
    %c0_2 = arith.constant 0 : index
    %3 = vector.load %arg3[%c0, %c0_1, %c0_2] : memref<1x2x256xf32, #tpu.memory_space<vmem>>, vector<1x2x256xf32>
    %4 = vector.shape_cast %3 : vector<1x2x256xf32> to vector<2x256xf32>
    %c0_3 = arith.constant 0 : index
    %c0_4 = arith.constant 0 : index
    %c0_5 = arith.constant 0 : index
    %5 = vector.load %arg4[%c0_3, %c0_4, %c0_5] : memref<1x4x256xf32, #tpu.memory_space<vmem>>, vector<1x4x256xf32>
    %6 = vector.shape_cast %5 : vector<1x4x256xf32> to vector<4x256xf32>
    %c0_6 = arith.constant 0 : index
    %c0_7 = arith.constant 0 : index
    %c0_8 = arith.constant 0 : index
    %7 = vector.load %arg5[%c0_6, %c0_7, %c0_8] : memref<1x4x256xf32, #tpu.memory_space<vmem>>, vector<1x4x256xf32>
    %8 = vector.shape_cast %7 : vector<1x4x256xf32> to vector<4x256xf32>
    %9 = vector.extract_strided_slice %4 {offsets = [0, 0], sizes = [1, 256], strides = [1, 1]} : vector<2x256xf32> to vector<1x256xf32>
    %10 = vector.extract_strided_slice %4 {offsets = [1, 0], sizes = [1, 256], strides = [1, 1]} : vector<2x256xf32> to vector<1x256xf32>
    %11 = math.floor %9 : vector<1x256xf32>
    %12 = math.floor %10 : vector<1x256xf32>
    %13 = arith.subf %9, %11 : vector<1x256xf32>
    %14 = arith.subf %10, %12 : vector<1x256xf32>
    %15 = arith.mulf %6, %8 : vector<4x256xf32>
    %16 = tpu.concatenate %15, %8 in 0 : vector<4x256xf32>, vector<4x256xf32> -> vector<8x256xf32>
    %cst = arith.constant 1.000000e+00 : f32
    %17 = vector.broadcast %cst : f32 to vector<1x256xf32>
    %18 = arith.subf %17, %13 : vector<1x256xf32>
    %cst_9 = arith.constant 1.000000e+00 : f32
    %19 = vector.broadcast %cst_9 : f32 to vector<1x256xf32>
    %20 = arith.subf %19, %14 : vector<1x256xf32>
    %21 = arith.mulf %18, %20 : vector<1x256xf32>
    %cst_10 = arith.constant 1.000000e+00 : f32
    %22 = vector.broadcast %cst_10 : f32 to vector<1x256xf32>
    %23 = arith.subf %22, %14 : vector<1x256xf32>
    %24 = arith.mulf %13, %23 : vector<1x256xf32>
    %cst_11 = arith.constant 1.000000e+00 : f32
    %25 = vector.broadcast %cst_11 : f32 to vector<1x256xf32>
    %26 = arith.subf %25, %13 : vector<1x256xf32>
    %27 = arith.mulf %26, %14 : vector<1x256xf32>
    %28 = arith.mulf %13, %14 : vector<1x256xf32>
    %cst_12 = arith.constant 0.000000e+00 : f32
    %29 = vector.broadcast %cst_12 : f32 to vector<1x256xf32>
    %30 = arith.addf %11, %29 : vector<1x256xf32>
    %cst_13 = arith.constant 0.000000e+00 : f32
    %31 = vector.broadcast %cst_13 : f32 to vector<1x256xf32>
    %32 = arith.addf %12, %31 : vector<1x256xf32>
    %cst_14 = arith.constant 0.000000e+00 : f32
    %33 = vector.broadcast %cst_14 : f32 to vector<1x256xf32>
    %34 = arith.cmpf oge, %30, %33 : vector<1x256xf32>
    %cst_15 = arith.constant 1.600000e+01 : f32
    %35 = vector.broadcast %cst_15 : f32 to vector<1x256xf32>
    %36 = arith.cmpf olt, %30, %35 : vector<1x256xf32>
    %37 = arith.andi %34, %36 : vector<1x256xi1>
    %cst_16 = arith.constant 0.000000e+00 : f32
    %38 = vector.broadcast %cst_16 : f32 to vector<1x256xf32>
    %39 = arith.cmpf oge, %32, %38 : vector<1x256xf32>
    %40 = arith.andi %37, %39 : vector<1x256xi1>
    %cst_17 = arith.constant 1.600000e+01 : f32
    %41 = vector.broadcast %cst_17 : f32 to vector<1x256xf32>
    %42 = arith.cmpf olt, %32, %41 : vector<1x256xf32>
    %43 = arith.andi %40, %42 : vector<1x256xi1>
    %cst_18 = arith.constant 1.600000e+01 : f32
    %44 = vector.broadcast %cst_18 : f32 to vector<1x256xf32>
    %45 = arith.mulf %32, %44 : vector<1x256xf32>
    %46 = arith.addf %45, %30 : vector<1x256xf32>
    %cst_19 = arith.constant -1.000000e+00 : f32
    %47 = vector.broadcast %cst_19 : f32 to vector<1x256xf32>
    %48 = arith.select %43, %46, %47 : vector<1x256xi1>, vector<1x256xf32>
    %49 = arith.fptosi %48 : vector<1x256xf32> to vector<1x256xi32>
    %50 = vector.broadcast %21 : vector<1x256xf32> to vector<8x256xf32>
    %51 = arith.mulf %16, %50 : vector<8x256xf32>
    %cst_20 = arith.constant 1.000000e+00 : f32
    %52 = vector.broadcast %cst_20 : f32 to vector<1x256xf32>
    %53 = arith.addf %11, %52 : vector<1x256xf32>
    %cst_21 = arith.constant 0.000000e+00 : f32
    %54 = vector.broadcast %cst_21 : f32 to vector<1x256xf32>
    %55 = arith.addf %12, %54 : vector<1x256xf32>
    %cst_22 = arith.constant 0.000000e+00 : f32
    %56 = vector.broadcast %cst_22 : f32 to vector<1x256xf32>
    %57 = arith.cmpf oge, %53, %56 : vector<1x256xf32>
    %cst_23 = arith.constant 1.600000e+01 : f32
    %58 = vector.broadcast %cst_23 : f32 to vector<1x256xf32>
    %59 = arith.cmpf olt, %53, %58 : vector<1x256xf32>
    %60 = arith.andi %57, %59 : vector<1x256xi1>
    %cst_24 = arith.constant 0.000000e+00 : f32
    %61 = vector.broadcast %cst_24 : f32 to vector<1x256xf32>
    %62 = arith.cmpf oge, %55, %61 : vector<1x256xf32>
    %63 = arith.andi %60, %62 : vector<1x256xi1>
    %cst_25 = arith.constant 1.600000e+01 : f32
    %64 = vector.broadcast %cst_25 : f32 to vector<1x256xf32>
    %65 = arith.cmpf olt, %55, %64 : vector<1x256xf32>
    %66 = arith.andi %63, %65 : vector<1x256xi1>
    %cst_26 = arith.constant 1.600000e+01 : f32
    %67 = vector.broadcast %cst_26 : f32 to vector<1x256xf32>
    %68 = arith.mulf %55, %67 : vector<1x256xf32>
    %69 = arith.addf %68, %53 : vector<1x256xf32>
    %cst_27 = arith.constant -1.000000e+00 : f32
    %70 = vector.broadcast %cst_27 : f32 to vector<1x256xf32>
    %71 = arith.select %66, %69, %70 : vector<1x256xi1>, vector<1x256xf32>
    %72 = arith.fptosi %71 : vector<1x256xf32> to vector<1x256xi32>
    %73 = vector.broadcast %24 : vector<1x256xf32> to vector<8x256xf32>
    %74 = arith.mulf %16, %73 : vector<8x256xf32>
    %cst_28 = arith.constant 0.000000e+00 : f32
    %75 = vector.broadcast %cst_28 : f32 to vector<1x256xf32>
    %76 = arith.addf %11, %75 : vector<1x256xf32>
    %cst_29 = arith.constant 1.000000e+00 : f32
    %77 = vector.broadcast %cst_29 : f32 to vector<1x256xf32>
    %78 = arith.addf %12, %77 : vector<1x256xf32>
    %cst_30 = arith.constant 0.000000e+00 : f32
    %79 = vector.broadcast %cst_30 : f32 to vector<1x256xf32>
    %80 = arith.cmpf oge, %76, %79 : vector<1x256xf32>
    %cst_31 = arith.constant 1.600000e+01 : f32
    %81 = vector.broadcast %cst_31 : f32 to vector<1x256xf32>
    %82 = arith.cmpf olt, %76, %81 : vector<1x256xf32>
    %83 = arith.andi %80, %82 : vector<1x256xi1>
    %cst_32 = arith.constant 0.000000e+00 : f32
    %84 = vector.broadcast %cst_32 : f32 to vector<1x256xf32>
    %85 = arith.cmpf oge, %78, %84 : vector<1x256xf32>
    %86 = arith.andi %83, %85 : vector<1x256xi1>
    %cst_33 = arith.constant 1.600000e+01 : f32
    %87 = vector.broadcast %cst_33 : f32 to vector<1x256xf32>
    %88 = arith.cmpf olt, %78, %87 : vector<1x256xf32>
    %89 = arith.andi %86, %88 : vector<1x256xi1>
    %cst_34 = arith.constant 1.600000e+01 : f32
    %90 = vector.broadcast %cst_34 : f32 to vector<1x256xf32>
    %91 = arith.mulf %78, %90 : vector<1x256xf32>
    %92 = arith.addf %91, %76 : vector<1x256xf32>
    %cst_35 = arith.constant -1.000000e+00 : f32
    %93 = vector.broadcast %cst_35 : f32 to vector<1x256xf32>
    %94 = arith.select %89, %92, %93 : vector<1x256xi1>, vector<1x256xf32>
    %95 = arith.fptosi %94 : vector<1x256xf32> to vector<1x256xi32>
    %96 = vector.broadcast %27 : vector<1x256xf32> to vector<8x256xf32>
    %97 = arith.mulf %16, %96 : vector<8x256xf32>
    %cst_36 = arith.constant 1.000000e+00 : f32
    %98 = vector.broadcast %cst_36 : f32 to vector<1x256xf32>
    %99 = arith.addf %11, %98 : vector<1x256xf32>
    %cst_37 = arith.constant 1.000000e+00 : f32
    %100 = vector.broadcast %cst_37 : f32 to vector<1x256xf32>
    %101 = arith.addf %12, %100 : vector<1x256xf32>
    %cst_38 = arith.constant 0.000000e+00 : f32
    %102 = vector.broadcast %cst_38 : f32 to vector<1x256xf32>
    %103 = arith.cmpf oge, %99, %102 : vector<1x256xf32>
    %cst_39 = arith.constant 1.600000e+01 : f32
    %104 = vector.broadcast %cst_39 : f32 to vector<1x256xf32>
    %105 = arith.cmpf olt, %99, %104 : vector<1x256xf32>
    %106 = arith.andi %103, %105 : vector<1x256xi1>
    %cst_40 = arith.constant 0.000000e+00 : f32
    %107 = vector.broadcast %cst_40 : f32 to vector<1x256xf32>
    %108 = arith.cmpf oge, %101, %107 : vector<1x256xf32>
    %109 = arith.andi %106, %108 : vector<1x256xi1>
    %cst_41 = arith.constant 1.600000e+01 : f32
    %110 = vector.broadcast %cst_41 : f32 to vector<1x256xf32>
    %111 = arith.cmpf olt, %101, %110 : vector<1x256xf32>
    %112 = arith.andi %109, %111 : vector<1x256xi1>
    %cst_42 = arith.constant 1.600000e+01 : f32
    %113 = vector.broadcast %cst_42 : f32 to vector<1x256xf32>
    %114 = arith.mulf %101, %113 : vector<1x256xf32>
    %115 = arith.addf %114, %99 : vector<1x256xf32>
    %cst_43 = arith.constant -1.000000e+00 : f32
    %116 = vector.broadcast %cst_43 : f32 to vector<1x256xf32>
    %117 = arith.select %112, %115, %116 : vector<1x256xi1>, vector<1x256xf32>
    %118 = arith.fptosi %117 : vector<1x256xf32> to vector<1x256xi32>
    %119 = vector.broadcast %28 : vector<1x256xf32> to vector<8x256xf32>
    %120 = arith.mulf %16, %119 : vector<8x256xf32>
    %121 = tpu.concatenate %51, %74, %97, %120 in 1 : vector<8x256xf32>, vector<8x256xf32>, vector<8x256xf32>, vector<8x256xf32> -> vector<8x1024xf32>
    %122 = tpu.concatenate %49, %72, %95, %118 in 1 : vector<1x256xi32>, vector<1x256xi32>, vector<1x256xi32>, vector<1x256xi32> -> vector<1x1024xi32>
    %c256_i32 = arith.constant 256 : i32
    %123 = arith.muli %arg1, %c256_i32 : i32
    %124 = tpu.iota {dimensions = array<i32: 0>} : vector<256x1024xi32>
    %125 = vector.broadcast %123 : i32 to vector<256x1024xi32>
    %126 = arith.addi %125, %124 : vector<256x1024xi32>
    %127 = vector.broadcast %122 : vector<1x1024xi32> to vector<256x1024xi32>
    %128 = arith.cmpi eq, %126, %127 : vector<256x1024xi32>
    %129 = arith.extui %128 : vector<256x1024xi1> to vector<256x1024xi32>
    %130 = arith.sitofp %129 : vector<256x1024xi32> to vector<256x1024xf32>
    %c0_44 = arith.constant 0 : index
    %c0_45 = arith.constant 0 : index
    %131 = vector.load %arg7[%c0_44, %c0_45] : memref<8x256xf32, #tpu.memory_space<vmem>>, vector<8x256xf32>
    %cst_46 = arith.constant dense<0.000000e+00> : vector<8x256xf32>
    %132 = tpu.matmul %121, %130, %cst_46 {dimension_numbers = #tpu.dot_dimension_numbers<[1], [1], [0], [0], [0, 0, 1, 0], [], []>} : vector<8x1024xf32>, vector<256x1024xf32>, vector<8x256xf32> -> vector<8x256xf32>
    %133 = arith.addf %131, %132 : vector<8x256xf32>
    %c0_47 = arith.constant 0 : index
    %c0_48 = arith.constant 0 : index
    %134 = vector.load %arg7[%c0_47, %c0_48] : memref<8x256xf32, #tpu.memory_space<vmem>>, vector<8x256xf32>
    tpu.vector_store %arg7[%c0_47, %c0_48], %133 {strides = array<i32>} : memref<8x256xf32, #tpu.memory_space<vmem>>, vector<8x256xf32>,
    %c0_i32_49 = arith.constant 0 : i32
    %135 = arith.cmpi eq, %arg2, %c0_i32_49 : i32
    %136 = arith.extui %135 : i1 to i32
    %c0_i32_50 = arith.constant 0 : i32
    %137 = arith.cmpi ne, %136, %c0_i32_50 : i32
    scf.if %137 {
      %c0_51 = arith.constant 0 : index
      %c0_52 = arith.constant 0 : index
      %138 = vector.load %arg7[%c0_51, %c0_52] : memref<8x256xf32, #tpu.memory_space<vmem>>, vector<8x256xf32>
      %139 = vector.extract_strided_slice %138 {offsets = [0, 0], sizes = [4, 256], strides = [1, 1]} : vector<8x256xf32> to vector<4x256xf32>
      %140 = vector.extract_strided_slice %138 {offsets = [4, 0], sizes = [4, 256], strides = [1, 1]} : vector<8x256xf32> to vector<4x256xf32>
      %cst_53 = arith.constant 0.000000e+00 : f32
      %141 = vector.broadcast %cst_53 : f32 to vector<4x256xf32>
      %142 = arith.cmpf one, %140, %141 : vector<4x256xf32>
      %cst_54 = arith.constant 1.000000e+00 : f32
      %143 = vector.broadcast %cst_54 : f32 to vector<4x256xf32>
      %144 = arith.select %142, %140, %143 : vector<4x256xi1>, vector<4x256xf32>
      %145 = tpu.reciprocal %144 : vector<4x256xf32> -> vector<4x256xf32>
      %146 = arith.mulf %139, %145 : vector<4x256xf32>
      %cst_55 = arith.constant 0.000000e+00 : f32
      %147 = vector.broadcast %cst_55 : f32 to vector<4x256xf32>
      %148 = arith.select %142, %146, %147 : vector<4x256xi1>, vector<4x256xf32>
      %c0_56 = arith.constant 0 : index
      %c0_57 = arith.constant 0 : index
      %c0_58 = arith.constant 0 : index
      %149 = vector.load %arg6[%c0_56, %c0_57, %c0_58] : memref<1x4x256xf32, #tpu.memory_space<vmem>>, vector<1x4x256xf32>
      %150 = vector.shape_cast %149 : vector<1x4x256xf32> to vector<4x256xf32>
      %151 = vector.shape_cast %148 : vector<4x256xf32> to vector<1x4x256xf32>
      tpu.vector_store %arg6[%c0_56, %c0_57, %c0_58], %151 {strides = array<i32>} : memref<1x4x256xf32, #tpu.memory_space<vmem>>, vector<1x4x256xf32>,
    } else {
    }
    return
  }
  func.func @transform_0(%arg0: i32, %arg1: i32, %arg2: i32) -> (i32, i32, i32) {
    %c0_i32 = arith.constant 0 : i32
    %c0_i32_0 = arith.constant 0 : i32
    return %arg0, %c0_i32, %arg2 : i32, i32, i32
  }
  func.func @transform_1(%arg0: i32, %arg1: i32, %arg2: i32) -> (i32, i32, i32) {
    %c0_i32 = arith.constant 0 : i32
    %c0_i32_0 = arith.constant 0 : i32
    return %arg0, %c0_i32, %arg2 : i32, i32, i32
  }
  func.func @transform_2(%arg0: i32, %arg1: i32, %arg2: i32) -> (i32, i32, i32) {
    %c0_i32 = arith.constant 0 : i32
    %c0_i32_0 = arith.constant 0 : i32
    return %arg0, %c0_i32, %arg2 : i32, i32, i32
  }
  func.func @transform_3(%arg0: i32, %arg1: i32, %arg2: i32) -> (i32, i32, i32) {
    %c0_i32 = arith.constant 0 : i32
    %c0_i32_0 = arith.constant 0 : i32
    return %arg0, %c0_i32, %arg1 : i32, i32, i32
  }
}

</mosaic_0001>

<llo_original>
// kernel: tpu_custom_call.1
$region0: #{tpu_custom_call.1}
  #allocation0 [shape = 'u32[]', space=smem, size = 0x4, offset = 0x4, fixed_abs, tag = 'smem constant byte address 0x4 - core index']
  #allocation1 [shape = 'u32[144,128]{1,0:T(1,128)}', space=vmem, size = 0x12000, scoped, tag = 'internal scratch']
  #allocation2 [shape = 'f32[8,256]{1,0:T(8,128)}', space=vmem, size = 0x2000, scoped, tag = 'scratch operand']
  %s0 = inlined_call_operand.hbm [shape: f32[2,2,256], index: 0, kind: input, shape index: {}]
  %s1 = inlined_call_operand.hbm [shape: f32[2,4,256], index: 1, kind: input, shape index: {}]
  %s2 = inlined_call_operand.hbm [shape: f32[2,4,256], index: 2, kind: input, shape index: {}]
  %s3 = inlined_call_operand.hbm [shape: f32[2,4,256], index: 3, kind: output, shape index: {}]
  %s4 = sld [smem:[#allocation0]]
  $region65: #{tpu_custom_call.1} parent=0
    _
  %s6 = ssub.s32 1, %s4
  %s7 = scalar_select 0, %s6, %s4
  $region1: #{tpu_custom_call.1} parent=0
    #allocation3 [shape = 'u8[4096]{0}', space=vmem, size = 0x1000, scoped, tag = 'input window, operand 0']
    #allocation4 [shape = 's32[2]{0}', space=sflag, size = 0x8, scoped, tag = 'scoped memory for tpu_custom_call.1']
    #allocation5 [shape = 's32[2]{0}', space=sflag, size = 0x8, scoped, tag = 'scoped memory for tpu_custom_call.1']
    #allocation6 [shape = 'u8[8192]{0}', space=vmem, size = 0x2000, scoped, tag = 'input window, operand 1']
    #allocation7 [shape = 's32[2]{0}', space=sflag, size = 0x8, scoped, tag = 'scoped memory for tpu_custom_call.1']
    #allocation8 [shape = 'u8[8192]{0}', space=vmem, size = 0x2000, scoped, tag = 'input window, operand 2']
    #allocation9 [shape = 'u8[8192]{0}', space=vmem, size = 0x2000, scoped, tag = 'output window, operand 0']
    %8 = vsyncpa [#allocation4], 0
    %s9 = scalar_lea.sflag [#allocation4], 1
    %10 = vsyncpa %s9, 0
    %11 = vsyncpa [#allocation7], 0
    %s12 = scalar_lea.sflag [#allocation7], 1
    %13 = vsyncpa %s12, 0
    %14 = vsyncpa [#allocation5], 0
    %s15 = scalar_lea.sflag [#allocation5], 1
    %16 = vsyncpa %s15, 0
    loop: start=0, step=1, limit=4
    $region2: #{tpu_custom_call.1} parent=1 // loop_pre_header
      _
    $region3: #{tpu_custom_call.1} parent=1 // loop_header
      %s18 = sphi 0, %s22
      %p19 = scmp.ge.s32.totalorder %s18, 4
      %s25 = sphi 0, %s44
      %s26 = sphi 0, %s40
      %s27 = sphi 0, %s36
      %s28 = sphi 0, %s25
      %s29 = sphi 0, %s26
      %s30 = sphi 0, %s27
      %s31 = sphi 0, %s28
      %s32 = sphi 0, %s29
      %s33 = sphi 0, %s30
      %s49 = sphi 0, %s51
      %s52 = sphi 0, %s49
      %s53 = sphi 0, %s52
      %s69 = sphi 0, %s53
      %s77 = sphi 0, %s79
      %s80 = sphi 0, %s77
      %s81 = sphi 0, %s80
      %s97 = sphi 0, %s81
      %s105 = sphi 0, %s107
      %s108 = sphi 0, %s105
      %s109 = sphi 0, %s108
      %s125 = sphi 0, %s109
      %s133 = sphi 0, %s135
      %s136 = sphi 0, %s133
      %s137 = sphi 0, %s136
      %s153 = sphi 0, %s137
    $region4: #{tpu_custom_call.1} parent=1 // loop_header_branch
      %21 = sbr.rel (%p19) target = $region8
    $region5: #{tpu_custom_call.1} parent=1 // loop_body
      %s23 = ssub.s32 %s18, 1
      %s24 = ssub.s32 %s18, 2
      %s34 = sadd.s32 1, %s27
      %p35 = scmp.ge.s32.totalorder %s34, 1
      %s36 = scalar_select %p35, 0, %s34
      %s37 = sadd.s32 1, %s26
      %s38 = scalar_select %p35, %s37, %s26
      %p39 = scmp.ge.s32.totalorder %s38, 1
      %s40 = scalar_select %p39, 0, %s38
      %s41 = sadd.s32 1, %s25
      %s42 = scalar_select %p39, %s41, %s25
      %p43 = scmp.ge.s32.totalorder %s42, 2
      %s44 = scalar_select %p43, 0, %s42
      %s45 = ssub.s32 %s25, %s44
      %s46 = ssub.s32 %s27, %s36
      %s47 = sor.u32 %s45, %s46
      %p48 = scmp.eq.s32.totalorder %s47, 0
      %s50 = sadd.s32 %s49, 1
      %s51 = scalar_select %p48, %s49, %s50
      %p54 = pneg %p48
      %p55 = scmp.eq.s32.totalorder %s18, 1
      %p56 = por %p54, %p55
      %p57 = scmp.ne.s32.totalorder %s49, %s52
      %p58 = scmp.eq.s32.totalorder %s18, 0
      %p59 = por %p57, %p58
      %p60 = scmp.ne.s32.totalorder %s49, %s52
      %p61 = scmp.eq.s32.totalorder %s23, 1
      %p62 = por %p60, %p61
      %p63 = scmp.ne.s32.totalorder %s52, %s53
      %p64 = scmp.eq.s32.totalorder %s23, 0
      %p65 = por %p63, %p64
      %p66 = scmp.ne.s32.totalorder %s52, %s53
      %p67 = scmp.eq.s32.totalorder %s24, 1
      %p68 = por %p66, %p67
      %p70 = scmp.ne.s32.totalorder %s53, %s69
      %p71 = scmp.eq.s32.totalorder %s24, 0
      %p72 = por %p70, %p71
      %s73 = ssub.s32 %s25, %s44
      %s74 = ssub.s32 %s27, %s36
      %s75 = sor.u32 %s73, %s74
      %p76 = scmp.eq.s32.totalorder %s75, 0
      %s78 = sadd.s32 %s77, 1
      %s79 = scalar_select %p76, %s77, %s78
      %p82 = pneg %p76
      %p83 = scmp.eq.s32.totalorder %s18, 1
      %p84 = por %p82, %p83
      %p85 = scmp.ne.s32.totalorder %s77, %s80
      %p86 = scmp.eq.s32.totalorder %s18, 0
      %p87 = por %p85, %p86
      %p88 = scmp.ne.s32.totalorder %s77, %s80
      %p89 = scmp.eq.s32.totalorder %s23, 1
      %p90 = por %p88, %p89
      %p91 = scmp.ne.s32.totalorder %s80, %s81
      %p92 = scmp.eq.s32.totalorder %s23, 0
      %p93 = por %p91, %p92
      %p94 = scmp.ne.s32.totalorder %s80, %s81
      %p95 = scmp.eq.s32.totalorder %s24, 1
      %p96 = por %p94, %p95
      %p98 = scmp.ne.s32.totalorder %s81, %s97
      %p99 = scmp.eq.s32.totalorder %s24, 0
      %p100 = por %p98, %p99
      %s101 = ssub.s32 %s25, %s44
      %s102 = ssub.s32 %s27, %s36
      %s103 = sor.u32 %s101, %s102
      %p104 = scmp.eq.s32.totalorder %s103, 0
      %s106 = sadd.s32 %s105, 1
      %s107 = scalar_select %p104, %s105, %s106
      %p110 = pneg %p104
      %p111 = scmp.eq.s32.totalorder %s18, 1
      %p112 = por %p110, %p111
      %p113 = scmp.ne.s32.totalorder %s105, %s108
      %p114 = scmp.eq.s32.totalorder %s18, 0
      %p115 = por %p113, %p114
      %p116 = scmp.ne.s32.totalorder %s105, %s108
      %p117 = scmp.eq.s32.totalorder %s23, 1
      %p118 = por %p116, %p117
      %p119 = scmp.ne.s32.totalorder %s108, %s109
      %p120 = scmp.eq.s32.totalorder %s23, 0
      %p121 = por %p119, %p120
      %p122 = scmp.ne.s32.totalorder %s108, %s109
      %p123 = scmp.eq.s32.totalorder %s24, 1
      %p124 = por %p122, %p123
      %p126 = scmp.ne.s32.totalorder %s109, %s125
      %p127 = scmp.eq.s32.totalorder %s24, 0
      %p128 = por %p126, %p127
      %s129 = ssub.s32 %s25, %s44
      %s130 = ssub.s32 %s26, %s40
      %s131 = sor.u32 %s129, %s130
      %p132 = scmp.eq.s32.totalorder %s131, 0
      %s134 = sadd.s32 %s133, 1
      %s135 = scalar_select %p132, %s133, %s134
      %p138 = pneg %p132
      %p139 = scmp.eq.s32.totalorder %s18, 1
      %p140 = por %p138, %p139
      %p141 = scmp.ne.s32.totalorder %s133, %s136
      %p142 = scmp.eq.s32.totalorder %s18, 0
      %p143 = por %p141, %p142
      %p144 = scmp.ne.s32.totalorder %s133, %s136
      %p145 = scmp.eq.s32.totalorder %s23, 1
      %p146 = por %p144, %p145
      %p147 = scmp.ne.s32.totalorder %s136, %s137
      %p148 = scmp.eq.s32.totalorder %s23, 0
      %p149 = por %p147, %p148
      %p150 = scmp.ne.s32.totalorder %s136, %s137
      %p151 = scmp.eq.s32.totalorder %s24, 1
      %p152 = por %p150, %p151
      %p154 = scmp.ne.s32.totalorder %s137, %s153
      %p155 = scmp.eq.s32.totalorder %s24, 0
      %p156 = por %p154, %p155
      %p157 = scmp.le.s32.totalorder 1, %s18
      %p158 = scmp.lt.s32.totalorder %s18, 3
      %p159 = pnand %p157, %p158
      %p160 = pneg %p159
      // Predicated region
      $region9: #{tpu_custom_call.1} parent=5 // pred_check
        _
      $region10: #{tpu_custom_call.1} parent=5 // pred_check_branch
        %162 = sbr.rel (%p159) target = $region12
      $region11: #{tpu_custom_call.1} parent=5 // pred_region
        %s163 = ssub.s32 %s18, 1
      $region12: #{tpu_custom_call.1} parent=5 // pred_fallthru
        _
      %p164 = scmp.lt.s32.totalorder %s18, 2
      // Predicated region
      $region13: #{tpu_custom_call.1} parent=5 // pred_check
        %p165 = pneg %p164
      $region14: #{tpu_custom_call.1} parent=5 // pred_check_branch
        %167 = sbr.rel (%p165) target = $region16
      $region15: #{tpu_custom_call.1} parent=5 // pred_region
        // Predicated region
        $region17: #{tpu_custom_call.1} parent=15 // pred_check
          %p168 = pneg %p59
        $region18: #{tpu_custom_call.1} parent=15 // pred_check_branch
          %170 = sbr.rel (%p168) target = $region20
        $region19: #{tpu_custom_call.1} parent=15 // pred_region
          %s171 = sand.u32 %s49, 1
          %s172 = scalar_lea.sflag [#allocation4], %s171
          %s173 = sand.u32 %s49, 1
          %s174 = smul.addr %s173, 4
          %s175 = scalar_lea.vmem [#allocation3], %s174
          %s176 = smul.u32 2, %s27
          %s178 = ssub.s32 64, 64
          %179 = vsyncadd %s172, %s178
          %s180 = smul.addr %s25, 2
          %s181 = sadd.s32 %s176, %s180
          %s182 = smul.addr %s181, 32
          %s183 = scalar_lea.hbm %s0, %s182
          %s185 = sshll.u32 %s175, 4
          %s186 = int_to_ptr.vmem [resolvable:$true] %s185
          %188 = dma.hbm_to_vmem [thread:$0]  %s183, 64, %s186, %s172
        $region20: #{tpu_custom_call.1} parent=15 // pred_fallthru
          _
        // Predicated region
        $region21: #{tpu_custom_call.1} parent=15 // pred_check
          %p189 = pneg %p87
        $region22: #{tpu_custom_call.1} parent=15 // pred_check_branch
          %191 = sbr.rel (%p189) target = $region24
        $region23: #{tpu_custom_call.1} parent=15 // pred_region
          %s192 = sand.u32 %s18, 1
          %s193 = scalar_lea.sflag [#allocation7], %s192
          %s194 = sand.u32 %s77, 1
          %s195 = smul.addr %s194, 8
          %s196 = scalar_lea.vmem [#allocation6], %s195
          %s197 = smul.u32 2, %s27
          %s199 = ssub.s32 128, 128
          %200 = vsyncadd %s193, %s199
          %s201 = smul.addr %s25, 2
          %s202 = sadd.s32 %s197, %s201
          %s203 = smul.addr %s202, 64
          %s204 = scalar_lea.hbm %s1, %s203
          %s206 = sshll.u32 %s196, 4
          %s207 = int_to_ptr.vmem [resolvable:$true] %s206
          %209 = dma.hbm_to_vmem [thread:$0]  %s204, 128, %s207, %s193
        $region24: #{tpu_custom_call.1} parent=15 // pred_fallthru
          _
        // Predicated region
        $region25: #{tpu_custom_call.1} parent=15 // pred_check
          %p210 = pneg %p115
        $region26: #{tpu_custom_call.1} parent=15 // pred_check_branch
          %212 = sbr.rel (%p210) target = $region28
        $region27: #{tpu_custom_call.1} parent=15 // pred_region
          %s213 = sand.u32 %s18, 1
          %s214 = scalar_lea.sflag [#allocation7], %s213
          %s215 = sand.u32 %s105, 1
          %s216 = smul.addr %s215, 8
          %s217 = scalar_lea.vmem [#allocation8], %s216
          %s218 = smul.u32 2, %s27
          %s220 = ssub.s32 128, 128
          %221 = vsyncadd %s214, %s220
          %s222 = smul.addr %s25, 2
          %s223 = sadd.s32 %s218, %s222
          %s224 = smul.addr %s223, 64
          %s225 = scalar_lea.hbm %s2, %s224
          %s227 = sshll.u32 %s217, 4
          %s228 = int_to_ptr.vmem [resolvable:$true] %s227
          %230 = dma.hbm_to_vmem [thread:$0]  %s225, 128, %s228, %s214
        $region28: #{tpu_custom_call.1} parent=15 // pred_fallthru
          _
      $region16: #{tpu_custom_call.1} parent=5 // pred_fallthru
        _
      %p231 = scmp.le.s32.totalorder 1, %s18
      %p232 = scmp.lt.s32.totalorder %s18, 3
      %p233 = pnand %p231, %p232
      %p234 = pneg %p233
      // Predicated region
      $region29: #{tpu_custom_call.1} parent=5 // pred_check
        _
      $region30: #{tpu_custom_call.1} parent=5 // pred_check_branch
        %236 = sbr.rel (%p233) target = $region32
      $region31: #{tpu_custom_call.1} parent=5 // pred_region
        %s237 = ssub.s32 %s18, 1
        %s238 = sand.u32 %s52, 1
        %s239 = scalar_lea.sflag [#allocation4], %s238
        %s240 = sand.u32 %s52, 1
        %s241 = smul.addr %s240, 4
        %s242 = scalar_lea.vmem [#allocation3], %s241
        // Predicated region
        $region33: #{tpu_custom_call.1} parent=31 // pred_check
          %p243 = pneg %p65
        $region34: #{tpu_custom_call.1} parent=31 // pred_check_branch
          %245 = sbr.rel (%p243) target = $region36
        $region35: #{tpu_custom_call.1} parent=31 // pred_region
          %246 = dma.done %s239, 64
        $region36: #{tpu_custom_call.1} parent=31 // pred_fallthru
          _
        %s247 = sand.u32 %s23, 1
        %s248 = scalar_lea.sflag [#allocation7], %s247
        %s249 = sand.u32 %s80, 1
        %s250 = smul.addr %s249, 8
        %s251 = scalar_lea.vmem [#allocation6], %s250
        // Predicated region
        $region37: #{tpu_custom_call.1} parent=31 // pred_check
          %p252 = pneg %p93
        $region38: #{tpu_custom_call.1} parent=31 // pred_check_branch
          %254 = sbr.rel (%p252) target = $region40
        $region39: #{tpu_custom_call.1} parent=31 // pred_region
          %255 = dma.done %s248, 128
        $region40: #{tpu_custom_call.1} parent=31 // pred_fallthru
          _
        %s256 = sand.u32 %s23, 1
        %s257 = scalar_lea.sflag [#allocation7], %s256
        %s258 = sand.u32 %s108, 1
        %s259 = smul.addr %s258, 8
        %s260 = scalar_lea.vmem [#allocation8], %s259
        // Predicated region
        $region41: #{tpu_custom_call.1} parent=31 // pred_check
          %p261 = pneg %p121
        $region42: #{tpu_custom_call.1} parent=31 // pred_check_branch
          %263 = sbr.rel (%p261) target = $region44
        $region43: #{tpu_custom_call.1} parent=31 // pred_region
          %264 = dma.done %s257, 128
        $region44: #{tpu_custom_call.1} parent=31 // pred_fallthru
          _
        %s265 = sand.u32 %s52, 1
        %s266 = scalar_lea.sflag [#allocation4], %s265
        %s267 = sand.u32 %s52, 1
        %s268 = smul.addr %s267, 4
        %s269 = scalar_lea.vmem [#allocation3], %s268
        %p270 = pneg %p65
        %p271 = pneg %p62
        %s272 = sand.u32 %s23, 1
        %s273 = scalar_lea.sflag [#allocation7], %s272
        %s274 = sand.u32 %s80, 1
        %s275 = smul.addr %s274, 8
        %s276 = scalar_lea.vmem [#allocation6], %s275
        %p277 = pneg %p93
        %p278 = pneg %p90
        %s279 = sand.u32 %s23, 1
        %s280 = scalar_lea.sflag [#allocation7], %s279
        %s281 = sand.u32 %s108, 1
        %s282 = smul.addr %s281, 8
        %s283 = scalar_lea.vmem [#allocation8], %s282
        %p284 = pneg %p121
        %p285 = pneg %p118
        %p286 = pneg %p149
        %p287 = pneg %p146
        %s288 = sand.u32 %s136, 1
        %s289 = scalar_lea.sflag [#allocation5], %s288
        %s290 = sand.u32 %s136, 1
        %s291 = smul.addr %s290, 8
        %s292 = scalar_lea.vmem [#allocation9], %s291
        %s293 = smul.u32 2, %s30
        %s294 = smul.u32 2, %s30
        %s295 = smul.u32 2, %s30
        %s296 = smul.u32 2, %s29
        %p297 = scmp.eq.s32.totalorder %s30, 0
        // Predicated region
        $region45: #{tpu_custom_call.1} parent=31 // pred_check
          %p298 = pneg %p297
        $region46: #{tpu_custom_call.1} parent=31 // pred_check_branch
          %300 = sbr.rel (%p298) target = $region48
        $region47: #{tpu_custom_call.1} parent=31 // pred_region
          %301 = vst [vmem:[#allocation2] sm:$0xff] 0.0
          %302 = vst [vmem:[#allocation2 + $0x8] sm:$0xff] 0.0
        $region48: #{tpu_custom_call.1} parent=31 // pred_fallthru
          _
        %v303 = vld [vmem:[%s242] sm:$0xf]
        %v304 = vld [vmem:[%s251] sm:$0xff]
        %v305 = vld [vmem:[%s260] sm:$0xff]
        %v306 = vfloor.f32 %v303
        %v307 = vsub.f32 %v303, %v306
        %v308 = vmul.f32 %v304, %v305
        %v310 = vcombine.high %v308, %v308
        %v313 = vcombine.low %v305, %v305
        %vm315 = vcmask 1043456
        %v316 = vsel %vm315, %v308, %v313
        %v317 = vsel %vm315, %v310, %v305
        %v318 = vsub.f32 1.0, %v307
        %v320 = vrot.slane %v318, 7
        %v321 = vrot.slane %v320, 2
        %v323 = vmul.f32 %v318, %v321
        %v324 = vmul.f32 %v307, %v321
        %v326 = vrot.slane %v307, 7
        %v327 = vrot.slane %v326, 2
        %v329 = vmul.f32 %v318, %v327
        %v330 = vmul.f32 %v307, %v327
        %v331 = vadd.f32 %v306, 0.0
        %vm332 = vcmp.ge.f32.partialorder %v331, 0.0
        %vm333 = vcmp.lt.f32.partialorder %v331, 16.0
        %vm334 = vmand %vm332, %vm333
        %v335 = vsel %vm332, 1, 0
        %v336 = vrot.slane %v335, 7
        %v337 = vrot.slane %v336, 2
        %vm338 = vcmp.ne.s32.totalorder %v337, 0
        %vm339 = vmand %vm334, %vm338
        %v340 = vsel %vm333, 1, 0
        %v341 = vrot.slane %v340, 7
        %v342 = vrot.slane %v341, 2
        %vm343 = vcmp.ne.s32.totalorder %v342, 0
        %vm344 = vmand %vm339, %vm343
        %v345 = vmul.f32 %v331, 16.0
        %v347 = vrot.slane %v331, 7
        %v349 = vadd.f32 %v345, %v347
        %v351 = vrot.slane %v349, 7
        %v352 = vrot.slane %v351, 2
        %v354 = vsel %vm344, %v352, -1.0
        %v355 = vcvt.f32.s32.to.zero.pseudo %v354
        %v357 = vlaneseq
        %v358 = vshrl.u32 %v357, 7
        %v359 = vsub.s32 0, %v358
        %v360 = vrot.slane %v323, %v359
        %v361 = vlaneseq
        %v362 = vshrl.u32 %v361, 7
        %v363 = vsub.s32 2, %v362
        %v364 = vrot.slane %v323, %v363
        %v367 = vlaneseq
        %v368 = vshrl.u32 %v367, 7
        %v369 = vsub.s32 0, %v368
        %v370 = vrot.slane %v360, %v369
        %v371 = vlaneseq
        %v372 = vshrl.u32 %v371, 7
        %v373 = vsub.s32 0, %v372
        %v374 = vrot.slane %v364, %v373
        %v375 = vmul.f32 %v316, %v370
        %v376 = vmul.f32 %v317, %v374
        %v377 = vadd.f32 %v306, 1.0
        %vm378 = vcmp.ge.f32.partialorder %v377, 0.0
        %vm379 = vcmp.lt.f32.partialorder %v377, 16.0
        %vm380 = vmand %vm378, %vm379
        %vm381 = vmand %vm380, %vm338
        %vm382 = vmand %vm381, %vm343
        %v384 = vrot.slane %v377, 7
        %v386 = vadd.f32 %v345, %v384
        %v388 = vrot.slane %v386, 7
        %v389 = vrot.slane %v388, 2
        %v391 = vsel %vm382, %v389, -1.0
        %v392 = vcvt.f32.s32.to.zero.pseudo %v391
        %v394 = vlaneseq
        %v395 = vshrl.u32 %v394, 7
        %v396 = vsub.s32 0, %v395
        %v397 = vrot.slane %v324, %v396
        %v398 = vlaneseq
        %v399 = vshrl.u32 %v398, 7
        %v400 = vsub.s32 2, %v399
        %v401 = vrot.slane %v324, %v400
        %v404 = vlaneseq
        %v405 = vshrl.u32 %v404, 7
        %v406 = vsub.s32 0, %v405
        %v407 = vrot.slane %v397, %v406
        %v408 = vlaneseq
        %v409 = vshrl.u32 %v408, 7
        %v410 = vsub.s32 0, %v409
        %v411 = vrot.slane %v401, %v410
        %v412 = vmul.f32 %v316, %v407
        %v413 = vmul.f32 %v317, %v411
        %v414 = vsel %vm378, 1, 0
        %v415 = vrot.slane %v414, 7
        %v416 = vrot.slane %v415, 2
        %vm417 = vcmp.ne.s32.totalorder %v416, 0
        %vm418 = vmand %vm334, %vm417
        %v419 = vsel %vm379, 1, 0
        %v420 = vrot.slane %v419, 7
        %v421 = vrot.slane %v420, 2
        %vm422 = vcmp.ne.s32.totalorder %v421, 0
        %vm423 = vmand %vm418, %vm422
        %v424 = vmul.f32 %v377, 16.0
        %v425 = vadd.f32 %v424, %v347
        %v427 = vrot.slane %v425, 7
        %v428 = vrot.slane %v427, 2
        %v430 = vsel %vm423, %v428, -1.0
        %v431 = vcvt.f32.s32.to.zero.pseudo %v430
        %v433 = vlaneseq
        %v434 = vshrl.u32 %v433, 7
        %v435 = vsub.s32 0, %v434
        %v436 = vrot.slane %v329, %v435
        %v437 = vlaneseq
        %v438 = vshrl.u32 %v437, 7
        %v439 = vsub.s32 2, %v438
        %v440 = vrot.slane %v329, %v439
        %v443 = vlaneseq
        %v444 = vshrl.u32 %v443, 7
        %v445 = vsub.s32 0, %v444
        %v446 = vrot.slane %v436, %v445
        %v447 = vlaneseq
        %v448 = vshrl.u32 %v447, 7
        %v449 = vsub.s32 0, %v448
        %v450 = vrot.slane %v440, %v449
        %v451 = vmul.f32 %v316, %v446
        %v452 = vmul.f32 %v317, %v450
        %vm453 = vmand %vm380, %vm417
        %vm454 = vmand %vm453, %vm422
        %v455 = vadd.f32 %v424, %v384
        %v457 = vrot.slane %v455, 7
        %v458 = vrot.slane %v457, 2
        %v460 = vsel %vm454, %v458, -1.0
        %v461 = vcvt.f32.s32.to.zero.pseudo %v460
        %v463 = vlaneseq
        %v464 = vshrl.u32 %v463, 7
        %v465 = vsub.s32 0, %v464
        %v466 = vrot.slane %v330, %v465
        %v467 = vlaneseq
        %v468 = vshrl.u32 %v467, 7
        %v469 = vsub.s32 2, %v468
        %v470 = vrot.slane %v330, %v469
        %v473 = vlaneseq
        %v474 = vshrl.u32 %v473, 7
        %v475 = vsub.s32 0, %v474
        %v476 = vrot.slane %v466, %v475
        %v477 = vlaneseq
        %v478 = vshrl.u32 %v477, 7
        %v479 = vsub.s32 0, %v478
        %v480 = vrot.slane %v470, %v479
        %v481 = vmul.f32 %v316, %v476
        %v482 = vmul.f32 %v317, %v480
        %v483 = vlaneseq
        %v484 = vshrl.u32 %v483, 7
        %v485 = vsub.s32 0, %v484
        %v486 = vrot.slane %v355, %v485
        %v487 = vlaneseq
        %v488 = vshrl.u32 %v487, 7
        %v489 = vsub.s32 2, %v488
        %v490 = vrot.slane %v355, %v489
        %v491 = vlaneseq
        %v492 = vshrl.u32 %v491, 7
        %v493 = vsub.s32 0, %v492
        %v494 = vrot.slane %v392, %v493
        %v495 = vlaneseq
        %v496 = vshrl.u32 %v495, 7
        %v497 = vsub.s32 2, %v496
        %v498 = vrot.slane %v392, %v497
        %v499 = vlaneseq
        %v500 = vshrl.u32 %v499, 7
        %v501 = vsub.s32 0, %v500
        %v502 = vrot.slane %v431, %v501
        %v503 = vlaneseq
        %v504 = vshrl.u32 %v503, 7
        %v505 = vsub.s32 2, %v504
        %v506 = vrot.slane %v431, %v505
        %v507 = vlaneseq
        %v508 = vshrl.u32 %v507, 7
        %v509 = vsub.s32 0, %v508
        %v510 = vrot.slane %v461, %v509
        %v511 = vlaneseq
        %v512 = vshrl.u32 %v511, 7
        %v513 = vsub.s32 2, %v512
        %v514 = vrot.slane %v461, %v513
        %s515 = smul.u32 %s29, 256
        %v516 = vlaneseq
        %v517 = vshrl.u32 %v516, 7
        %v518 = vadd.s32 %v517, 8
        %v519 = vadd.s32 %v517, 16
        %v520 = vadd.s32 %v517, 24
        %v521 = vadd.s32 %v517, 32
        %v522 = vadd.s32 %v517, 40
        %v523 = vadd.s32 %v517, 48
        %v524 = vadd.s32 %v517, 56
        %v525 = vadd.s32 %v517, 64
        %v526 = vadd.s32 %v517, 72
        %v527 = vadd.s32 %v517, 80
        %v528 = vadd.s32 %v517, 88
        %v529 = vadd.s32 %v517, 96
        %v530 = vadd.s32 %v517, 104
        %v531 = vadd.s32 %v517, 112
        %v532 = vadd.s32 %v517, 120
        %v533 = vadd.s32 %v517, 128
        %v534 = vadd.s32 %v517, 136
        %v535 = vadd.s32 %v517, 144
        %v536 = vadd.s32 %v517, 152
        %v537 = vadd.s32 %v517, 160
        %v538 = vadd.s32 %v517, 168
        %v539 = vadd.s32 %v517, 176
        %v540 = vadd.s32 %v517, 184
        %v541 = vadd.s32 %v517, 192
        %v542 = vadd.s32 %v517, 200
        %v543 = vadd.s32 %v517, 208
        %v544 = vadd.s32 %v517, 216
        %v545 = vadd.s32 %v517, 224
        %v546 = vadd.s32 %v517, 232
        %v547 = vadd.s32 %v517, 240
        %v548 = vadd.s32 %v517, 248
        %v549 = vstv %s515
        %v550 = vadd.s32 %v549, %v517
        %v551 = vadd.s32 %v549, %v518
        %v552 = vadd.s32 %v549, %v519
        %v553 = vadd.s32 %v549, %v520
        %v554 = vadd.s32 %v549, %v521
        %v555 = vadd.s32 %v549, %v522
        %v556 = vadd.s32 %v549, %v523
        %v557 = vadd.s32 %v549, %v524
        %v558 = vadd.s32 %v549, %v525
        %v559 = vadd.s32 %v549, %v526
        %v560 = vadd.s32 %v549, %v527
        %v561 = vadd.s32 %v549, %v528
        %v562 = vadd.s32 %v549, %v529
        %v563 = vadd.s32 %v549, %v530
        %v564 = vadd.s32 %v549, %v531
        %v565 = vadd.s32 %v549, %v532
        %v566 = vadd.s32 %v549, %v533
        %v567 = vadd.s32 %v549, %v534
        %v568 = vadd.s32 %v549, %v535
        %v569 = vadd.s32 %v549, %v536
        %v570 = vadd.s32 %v549, %v537
        %v571 = vadd.s32 %v549, %v538
        %v572 = vadd.s32 %v549, %v539
        %v573 = vadd.s32 %v549, %v540
        %v574 = vadd.s32 %v549, %v541
        %v575 = vadd.s32 %v549, %v542
        %v576 = vadd.s32 %v549, %v543
        %v577 = vadd.s32 %v549, %v544
        %v578 = vadd.s32 %v549, %v545
        %v579 = vadd.s32 %v549, %v546
        %v580 = vadd.s32 %v549, %v547
        %v581 = vadd.s32 %v549, %v548
        %v582 = vlaneseq
        %v583 = vshrl.u32 %v582, 7
        %v584 = vsub.s32 0, %v583
        %v585 = vrot.slane %v486, %v584
        %v586 = vlaneseq
        %v587 = vshrl.u32 %v586, 7
        %v588 = vsub.s32 0, %v587
        %v589 = vrot.slane %v490, %v588
        %v590 = vlaneseq
        %v591 = vshrl.u32 %v590, 7
        %v592 = vsub.s32 0, %v591
        %v593 = vrot.slane %v494, %v592
        %v594 = vlaneseq
        %v595 = vshrl.u32 %v594, 7
        %v596 = vsub.s32 0, %v595
        %v597 = vrot.slane %v498, %v596
        %v598 = vlaneseq
        %v599 = vshrl.u32 %v598, 7
        %v600 = vsub.s32 0, %v599
        %v601 = vrot.slane %v502, %v600
        %v602 = vlaneseq
        %v603 = vshrl.u32 %v602, 7
        %v604 = vsub.s32 0, %v603
        %v605 = vrot.slane %v506, %v604
        %v606 = vlaneseq
        %v607 = vshrl.u32 %v606, 7
        %v608 = vsub.s32 0, %v607
        %v609 = vrot.slane %v510, %v608
        %v610 = vlaneseq
        %v611 = vshrl.u32 %v610, 7
        %v612 = vsub.s32 0, %v611
        %v613 = vrot.slane %v514, %v612
        %vm614 = vcmp.eq.s32.totalorder %v550, %v585
        %vm615 = vcmp.eq.s32.totalorder %v550, %v589
        %vm616 = vcmp.eq.s32.totalorder %v550, %v593
        %vm617 = vcmp.eq.s32.totalorder %v550, %v597
        %vm618 = vcmp.eq.s32.totalorder %v550, %v601
        %vm619 = vcmp.eq.s32.totalorder %v550, %v605
        %vm620 = vcmp.eq.s32.totalorder %v550, %v609
        %vm621 = vcmp.eq.s32.totalorder %v550, %v613
        %vm622 = vcmp.eq.s32.totalorder %v551, %v585
        %vm623 = vcmp.eq.s32.totalorder %v551, %v589
        %vm624 = vcmp.eq.s32.totalorder %v551, %v593
        %vm625 = vcmp.eq.s32.totalorder %v551, %v597
        %vm626 = vcmp.eq.s32.totalorder %v551, %v601
        %vm627 = vcmp.eq.s32.totalorder %v551, %v605
        %vm628 = vcmp.eq.s32.totalorder %v551, %v609
        %vm629 = vcmp.eq.s32.totalorder %v551, %v613
        %vm630 = vcmp.eq.s32.totalorder %v552, %v585
        %vm631 = vcmp.eq.s32.totalorder %v552, %v589
        %vm632 = vcmp.eq.s32.totalorder %v552, %v593
        %vm633 = vcmp.eq.s32.totalorder %v552, %v597
        %vm634 = vcmp.eq.s32.totalorder %v552, %v601
        %vm635 = vcmp.eq.s32.totalorder %v552, %v605
        %vm636 = vcmp.eq.s32.totalorder %v552, %v609
        %vm637 = vcmp.eq.s32.totalorder %v552, %v613
        %vm638 = vcmp.eq.s32.totalorder %v553, %v585
        %vm639 = vcmp.eq.s32.totalorder %v553, %v589
        %vm640 = vcmp.eq.s32.totalorder %v553, %v593
        %vm641 = vcmp.eq.s32.totalorder %v553, %v597
        %vm642 = vcmp.eq.s32.totalorder %v553, %v601
        %vm643 = vcmp.eq.s32.totalorder %v553, %v605
        %vm644 = vcmp.eq.s32.totalorder %v553, %v609
        %vm645 = vcmp.eq.s32.totalorder %v553, %v613
        %vm646 = vcmp.eq.s32.totalorder %v554, %v585
        %vm647 = vcmp.eq.s32.totalorder %v554, %v589
        %vm648 = vcmp.eq.s32.totalorder %v554, %v593
        %vm649 = vcmp.eq.s32.totalorder %v554, %v597
        %vm650 = vcmp.eq.s32.totalorder %v554, %v601
        %vm651 = vcmp.eq.s32.totalorder %v554, %v605
        %vm652 = vcmp.eq.s32.totalorder %v554, %v609
        %vm653 = vcmp.eq.s32.totalorder %v554, %v613
        %vm654 = vcmp.eq.s32.totalorder %v555, %v585
        %vm655 = vcmp.eq.s32.totalorder %v555, %v589
        %vm656 = vcmp.eq.s32.totalorder %v555, %v593
        %vm657 = vcmp.eq.s32.totalorder %v555, %v597
        %vm658 = vcmp.eq.s32.totalorder %v555, %v601
        %vm659 = vcmp.eq.s32.totalorder %v555, %v605
        %vm660 = vcmp.eq.s32.totalorder %v555, %v609
        %vm661 = vcmp.eq.s32.totalorder %v555, %v613
        %vm662 = vcmp.eq.s32.totalorder %v556, %v585
        %vm663 = vcmp.eq.s32.totalorder %v556, %v589
        %vm664 = vcmp.eq.s32.totalorder %v556, %v593
        %vm665 = vcmp.eq.s32.totalorder %v556, %v597
        %vm666 = vcmp.eq.s32.totalorder %v556, %v601
        %vm667 = vcmp.eq.s32.totalorder %v556, %v605
        %vm668 = vcmp.eq.s32.totalorder %v556, %v609
        %vm669 = vcmp.eq.s32.totalorder %v556, %v613
        %vm670 = vcmp.eq.s32.totalorder %v557, %v585
        %vm671 = vcmp.eq.s32.totalorder %v557, %v589
        %vm672 = vcmp.eq.s32.totalorder %v557, %v593
        %vm673 = vcmp.eq.s32.totalorder %v557, %v597
        %vm674 = vcmp.eq.s32.totalorder %v557, %v601
        %vm675 = vcmp.eq.s32.totalorder %v557, %v605
        %vm676 = vcmp.eq.s32.totalorder %v557, %v609
        %vm677 = vcmp.eq.s32.totalorder %v557, %v613
        %vm678 = vcmp.eq.s32.totalorder %v558, %v585
        %vm679 = vcmp.eq.s32.totalorder %v558, %v589
        %vm680 = vcmp.eq.s32.totalorder %v558, %v593
        %vm681 = vcmp.eq.s32.totalorder %v558, %v597
        %vm682 = vcmp.eq.s32.totalorder %v558, %v601
        %vm683 = vcmp.eq.s32.totalorder %v558, %v605
        %vm684 = vcmp.eq.s32.totalorder %v558, %v609
        %vm685 = vcmp.eq.s32.totalorder %v558, %v613
        %vm686 = vcmp.eq.s32.totalorder %v559, %v585
        %vm687 = vcmp.eq.s32.totalorder %v559, %v589
        %vm688 = vcmp.eq.s32.totalorder %v559, %v593
        %vm689 = vcmp.eq.s32.totalorder %v559, %v597
        %vm690 = vcmp.eq.s32.totalorder %v559, %v601
        %vm691 = vcmp.eq.s32.totalorder %v559, %v605
        %vm692 = vcmp.eq.s32.totalorder %v559, %v609
        %vm693 = vcmp.eq.s32.totalorder %v559, %v613
        %vm694 = vcmp.eq.s32.totalorder %v560, %v585
        %vm695 = vcmp.eq.s32.totalorder %v560, %v589
        %vm696 = vcmp.eq.s32.totalorder %v560, %v593
        %vm697 = vcmp.eq.s32.totalorder %v560, %v597
        %vm698 = vcmp.eq.s32.totalorder %v560, %v601
        %vm699 = vcmp.eq.s32.totalorder %v560, %v605
        %vm700 = vcmp.eq.s32.totalorder %v560, %v609
        %vm701 = vcmp.eq.s32.totalorder %v560, %v613
        %vm702 = vcmp.eq.s32.totalorder %v561, %v585
        %vm703 = vcmp.eq.s32.totalorder %v561, %v589
        %vm704 = vcmp.eq.s32.totalorder %v561, %v593
        %vm705 = vcmp.eq.s32.totalorder %v561, %v597
        %vm706 = vcmp.eq.s32.totalorder %v561, %v601
        %vm707 = vcmp.eq.s32.totalorder %v561, %v605
        %vm708 = vcmp.eq.s32.totalorder %v561, %v609
        %vm709 = vcmp.eq.s32.totalorder %v561, %v613
        %vm710 = vcmp.eq.s32.totalorder %v562, %v585
        %vm711 = vcmp.eq.s32.totalorder %v562, %v589
        %vm712 = vcmp.eq.s32.totalorder %v562, %v593
        %vm713 = vcmp.eq.s32.totalorder %v562, %v597
        %vm714 = vcmp.eq.s32.totalorder %v562, %v601
        %vm715 = vcmp.eq.s32.totalorder %v562, %v605
        %vm716 = vcmp.eq.s32.totalorder %v562, %v609
        %vm717 = vcmp.eq.s32.totalorder %v562, %v613
        %vm718 = vcmp.eq.s32.totalorder %v563, %v585
        %vm719 = vcmp.eq.s32.totalorder %v563, %v589
        %vm720 = vcmp.eq.s32.totalorder %v563, %v593
        %vm721 = vcmp.eq.s32.totalorder %v563, %v597
        %vm722 = vcmp.eq.s32.totalorder %v563, %v601
        %vm723 = vcmp.eq.s32.totalorder %v563, %v605
        %vm724 = vcmp.eq.s32.totalorder %v563, %v609
        %vm725 = vcmp.eq.s32.totalorder %v563, %v613
        %vm726 = vcmp.eq.s32.totalorder %v564, %v585
        %vm727 = vcmp.eq.s32.totalorder %v564, %v589
        %vm728 = vcmp.eq.s32.totalorder %v564, %v593
        %vm729 = vcmp.eq.s32.totalorder %v564, %v597
        %vm730 = vcmp.eq.s32.totalorder %v564, %v601
        %vm731 = vcmp.eq.s32.totalorder %v564, %v605
        %vm732 = vcmp.eq.s32.totalorder %v564, %v609
        %vm733 = vcmp.eq.s32.totalorder %v564, %v613
        %vm734 = vcmp.eq.s32.totalorder %v565, %v585
        %vm735 = vcmp.eq.s32.totalorder %v565, %v589
        %vm736 = vcmp.eq.s32.totalorder %v565, %v593
        %vm737 = vcmp.eq.s32.totalorder %v565, %v597
        %vm738 = vcmp.eq.s32.totalorder %v565, %v601
        %vm739 = vcmp.eq.s32.totalorder %v565, %v605
        %vm740 = vcmp.eq.s32.totalorder %v565, %v609
        %vm741 = vcmp.eq.s32.totalorder %v565, %v613
        %vm742 = vcmp.eq.s32.totalorder %v566, %v585
        %vm743 = vcmp.eq.s32.totalorder %v566, %v589
        %vm744 = vcmp.eq.s32.totalorder %v566, %v593
        %vm745 = vcmp.eq.s32.totalorder %v566, %v597
        %vm746 = vcmp.eq.s32.totalorder %v566, %v601
        %vm747 = vcmp.eq.s32.totalorder %v566, %v605
        %vm748 = vcmp.eq.s32.totalorder %v566, %v609
        %vm749 = vcmp.eq.s32.totalorder %v566, %v613
        %vm750 = vcmp.eq.s32.totalorder %v567, %v585
        %vm751 = vcmp.eq.s32.totalorder %v567, %v589
        %vm752 = vcmp.eq.s32.totalorder %v567, %v593
        %vm753 = vcmp.eq.s32.totalorder %v567, %v597
        %vm754 = vcmp.eq.s32.totalorder %v567, %v601
        %vm755 = vcmp.eq.s32.totalorder %v567, %v605
        %vm756 = vcmp.eq.s32.totalorder %v567, %v609
        %vm757 = vcmp.eq.s32.totalorder %v567, %v613
        %vm758 = vcmp.eq.s32.totalorder %v568, %v585
        %vm759 = vcmp.eq.s32.totalorder %v568, %v589
        %vm760 = vcmp.eq.s32.totalorder %v568, %v593
        %vm761 = vcmp.eq.s32.totalorder %v568, %v597
        %vm762 = vcmp.eq.s32.totalorder %v568, %v601
        %vm763 = vcmp.eq.s32.totalorder %v568, %v605
        %vm764 = vcmp.eq.s32.totalorder %v568, %v609
        %vm765 = vcmp.eq.s32.totalorder %v568, %v613
        %vm766 = vcmp.eq.s32.totalorder %v569, %v585
        %vm767 = vcmp.eq.s32.totalorder %v569, %v589
        %vm768 = vcmp.eq.s32.totalorder %v569, %v593
        %vm769 = vcmp.eq.s32.totalorder %v569, %v597
        %vm770 = vcmp.eq.s32.totalorder %v569, %v601
        %vm771 = vcmp.eq.s32.totalorder %v569, %v605
        %vm772 = vcmp.eq.s32.totalorder %v569, %v609
        %vm773 = vcmp.eq.s32.totalorder %v569, %v613
        %vm774 = vcmp.eq.s32.totalorder %v570, %v585
        %vm775 = vcmp.eq.s32.totalorder %v570, %v589
        %vm776 = vcmp.eq.s32.totalorder %v570, %v593
        %vm777 = vcmp.eq.s32.totalorder %v570, %v597
        %vm778 = vcmp.eq.s32.totalorder %v570, %v601
        %vm779 = vcmp.eq.s32.totalorder %v570, %v605
        %vm780 = vcmp.eq.s32.totalorder %v570, %v609
        %vm781 = vcmp.eq.s32.totalorder %v570, %v613
        %vm782 = vcmp.eq.s32.totalorder %v571, %v585
        %vm783 = vcmp.eq.s32.totalorder %v571, %v589
        %vm784 = vcmp.eq.s32.totalorder %v571, %v593
        %vm785 = vcmp.eq.s32.totalorder %v571, %v597
        %vm786 = vcmp.eq.s32.totalorder %v571, %v601
        %vm787 = vcmp.eq.s32.totalorder %v571, %v605
        %vm788 = vcmp.eq.s32.totalorder %v571, %v609
        %vm789 = vcmp.eq.s32.totalorder %v571, %v613
        %vm790 = vcmp.eq.s32.totalorder %v572, %v585
        %vm791 = vcmp.eq.s32.totalorder %v572, %v589
        %vm792 = vcmp.eq.s32.totalorder %v572, %v593
        %vm793 = vcmp.eq.s32.totalorder %v572, %v597
        %vm794 = vcmp.eq.s32.totalorder %v572, %v601
        %vm795 = vcmp.eq.s32.totalorder %v572, %v605
        %vm796 = vcmp.eq.s32.totalorder %v572, %v609
        %vm797 = vcmp.eq.s32.totalorder %v572, %v613
        %vm798 = vcmp.eq.s32.totalorder %v573, %v585
        %vm799 = vcmp.eq.s32.totalorder %v573, %v589
        %vm800 = vcmp.eq.s32.totalorder %v573, %v593
        %vm801 = vcmp.eq.s32.totalorder %v573, %v597
        %vm802 = vcmp.eq.s32.totalorder %v573, %v601
        %vm803 = vcmp.eq.s32.totalorder %v573, %v605
        %vm804 = vcmp.eq.s32.totalorder %v573, %v609
        %vm805 = vcmp.eq.s32.totalorder %v573, %v613
        %vm806 = vcmp.eq.s32.totalorder %v574, %v585
        %vm807 = vcmp.eq.s32.totalorder %v574, %v589
        %vm808 = vcmp.eq.s32.totalorder %v574, %v593
        %vm809 = vcmp.eq.s32.totalorder %v574, %v597
        %vm810 = vcmp.eq.s32.totalorder %v574, %v601
        %vm811 = vcmp.eq.s32.totalorder %v574, %v605
        %vm812 = vcmp.eq.s32.totalorder %v574, %v609
        %vm813 = vcmp.eq.s32.totalorder %v574, %v613
        %vm814 = vcmp.eq.s32.totalorder %v575, %v585
        %vm815 = vcmp.eq.s32.totalorder %v575, %v589
        %vm816 = vcmp.eq.s32.totalorder %v575, %v593
        %vm817 = vcmp.eq.s32.totalorder %v575, %v597
        %vm818 = vcmp.eq.s32.totalorder %v575, %v601
        %vm819 = vcmp.eq.s32.totalorder %v575, %v605
        %vm820 = vcmp.eq.s32.totalorder %v575, %v609
        %vm821 = vcmp.eq.s32.totalorder %v575, %v613
        %vm822 = vcmp.eq.s32.totalorder %v576, %v585
        %vm823 = vcmp.eq.s32.totalorder %v576, %v589
        %vm824 = vcmp.eq.s32.totalorder %v576, %v593
        %vm825 = vcmp.eq.s32.totalorder %v576, %v597
        %vm826 = vcmp.eq.s32.totalorder %v576, %v601
        %vm827 = vcmp.eq.s32.totalorder %v576, %v605
        %vm828 = vcmp.eq.s32.totalorder %v576, %v609
        %vm829 = vcmp.eq.s32.totalorder %v576, %v613
        %vm830 = vcmp.eq.s32.totalorder %v577, %v585
        %vm831 = vcmp.eq.s32.totalorder %v577, %v589
        %vm832 = vcmp.eq.s32.totalorder %v577, %v593
        %vm833 = vcmp.eq.s32.totalorder %v577, %v597
        %vm834 = vcmp.eq.s32.totalorder %v577, %v601
        %vm835 = vcmp.eq.s32.totalorder %v577, %v605
        %vm836 = vcmp.eq.s32.totalorder %v577, %v609
        %vm837 = vcmp.eq.s32.totalorder %v577, %v613
        %vm838 = vcmp.eq.s32.totalorder %v578, %v585
        %vm839 = vcmp.eq.s32.totalorder %v578, %v589
        %vm840 = vcmp.eq.s32.totalorder %v578, %v593
        %vm841 = vcmp.eq.s32.totalorder %v578, %v597
        %vm842 = vcmp.eq.s32.totalorder %v578, %v601
        %vm843 = vcmp.eq.s32.totalorder %v578, %v605
        %vm844 = vcmp.eq.s32.totalorder %v578, %v609
        %vm845 = vcmp.eq.s32.totalorder %v578, %v613
        %vm846 = vcmp.eq.s32.totalorder %v579, %v585
        %vm847 = vcmp.eq.s32.totalorder %v579, %v589
        %vm848 = vcmp.eq.s32.totalorder %v579, %v593
        %vm849 = vcmp.eq.s32.totalorder %v579, %v597
        %vm850 = vcmp.eq.s32.totalorder %v579, %v601
        %vm851 = vcmp.eq.s32.totalorder %v579, %v605
        %vm852 = vcmp.eq.s32.totalorder %v579, %v609
        %vm853 = vcmp.eq.s32.totalorder %v579, %v613
        %vm854 = vcmp.eq.s32.totalorder %v580, %v585
        %vm855 = vcmp.eq.s32.totalorder %v580, %v589
        %vm856 = vcmp.eq.s32.totalorder %v580, %v593
        %vm857 = vcmp.eq.s32.totalorder %v580, %v597
        %vm858 = vcmp.eq.s32.totalorder %v580, %v601
        %vm859 = vcmp.eq.s32.totalorder %v580, %v605
        %vm860 = vcmp.eq.s32.totalorder %v580, %v609
        %vm861 = vcmp.eq.s32.totalorder %v580, %v613
        %vm862 = vcmp.eq.s32.totalorder %v581, %v585
        %vm863 = vcmp.eq.s32.totalorder %v581, %v589
        %vm864 = vcmp.eq.s32.totalorder %v581, %v593
        %vm865 = vcmp.eq.s32.totalorder %v581, %v597
        %vm866 = vcmp.eq.s32.totalorder %v581, %v601
        %vm867 = vcmp.eq.s32.totalorder %v581, %v605
        %vm868 = vcmp.eq.s32.totalorder %v581, %v609
        %vm869 = vcmp.eq.s32.totalorder %v581, %v613
        %v870 = vsel %vm614, 1, 0
        %v871 = vsel %vm615, 1, 0
        %v872 = vsel %vm616, 1, 0
        %v873 = vsel %vm617, 1, 0
        %v874 = vsel %vm618, 1, 0
        %v875 = vsel %vm619, 1, 0
        %v876 = vsel %vm620, 1, 0
        %v877 = vsel %vm621, 1, 0
        %v878 = vsel %vm622, 1, 0
        %v879 = vsel %vm623, 1, 0
        %v880 = vsel %vm624, 1, 0
        %v881 = vsel %vm625, 1, 0
        %v882 = vsel %vm626, 1, 0
        %v883 = vsel %vm627, 1, 0
        %v884 = vsel %vm628, 1, 0
        %v885 = vsel %vm629, 1, 0
        %v886 = vsel %vm630, 1, 0
        %v887 = vsel %vm631, 1, 0
        %v888 = vsel %vm632, 1, 0
        %v889 = vsel %vm633, 1, 0
        %v890 = vsel %vm634, 1, 0
        %v891 = vsel %vm635, 1, 0
        %v892 = vsel %vm636, 1, 0
        %v893 = vsel %vm637, 1, 0
        %v894 = vsel %vm638, 1, 0
        %v895 = vsel %vm639, 1, 0
        %v896 = vsel %vm640, 1, 0
        %v897 = vsel %vm641, 1, 0
        %v898 = vsel %vm642, 1, 0
        %v899 = vsel %vm643, 1, 0
        %v900 = vsel %vm644, 1, 0
        %v901 = vsel %vm645, 1, 0
        %v902 = vsel %vm646, 1, 0
        %v903 = vsel %vm647, 1, 0
        %v904 = vsel %vm648, 1, 0
        %v905 = vsel %vm649, 1, 0
        %v906 = vsel %vm650, 1, 0
        %v907 = vsel %vm651, 1, 0
        %v908 = vsel %vm652, 1, 0
        %v909 = vsel %vm653, 1, 0
        %v910 = vsel %vm654, 1, 0
        %v911 = vsel %vm655, 1, 0
        %v912 = vsel %vm656, 1, 0
        %v913 = vsel %vm657, 1, 0
        %v914 = vsel %vm658, 1, 0
        %v915 = vsel %vm659, 1, 0
        %v916 = vsel %vm660, 1, 0
        %v917 = vsel %vm661, 1, 0
        %v918 = vsel %vm662, 1, 0
        %v919 = vsel %vm663, 1, 0
        %v920 = vsel %vm664, 1, 0
        %v921 = vsel %vm665, 1, 0
        %v922 = vsel %vm666, 1, 0
        %v923 = vsel %vm667, 1, 0
        %v924 = vsel %vm668, 1, 0
        %v925 = vsel %vm669, 1, 0
        %v926 = vsel %vm670, 1, 0
        %v927 = vsel %vm671, 1, 0
        %v928 = vsel %vm672, 1, 0
        %v929 = vsel %vm673, 1, 0
        %v930 = vsel %vm674, 1, 0
        %v931 = vsel %vm675, 1, 0
        %v932 = vsel %vm676, 1, 0
        %v933 = vsel %vm677, 1, 0
        %v934 = vsel %vm678, 1, 0
        %v935 = vsel %vm679, 1, 0
        %v936 = vsel %vm680, 1, 0
        %v937 = vsel %vm681, 1, 0
        %v938 = vsel %vm682, 1, 0
        %v939 = vsel %vm683, 1, 0
        %v940 = vsel %vm684, 1, 0
        %v941 = vsel %vm685, 1, 0
        %v942 = vsel %vm686, 1, 0
        %v943 = vsel %vm687, 1, 0
        %v944 = vsel %vm688, 1, 0
        %v945 = vsel %vm689, 1, 0
        %v946 = vsel %vm690, 1, 0
        %v947 = vsel %vm691, 1, 0
        %v948 = vsel %vm692, 1, 0
        %v949 = vsel %vm693, 1, 0
        %v950 = vsel %vm694, 1, 0
        %v951 = vsel %vm695, 1, 0
        %v952 = vsel %vm696, 1, 0
        %v953 = vsel %vm697, 1, 0
        %v954 = vsel %vm698, 1, 0
        %v955 = vsel %vm699, 1, 0
        %v956 = vsel %vm700, 1, 0
        %v957 = vsel %vm701, 1, 0
        %v958 = vsel %vm702, 1, 0
        %v959 = vsel %vm703, 1, 0
        %v960 = vsel %vm704, 1, 0
        %v961 = vsel %vm705, 1, 0
        %v962 = vsel %vm706, 1, 0
        %v963 = vsel %vm707, 1, 0
        %v964 = vsel %vm708, 1, 0
        %v965 = vsel %vm709, 1, 0
        %v966 = vsel %vm710, 1, 0
        %v967 = vsel %vm711, 1, 0
        %v968 = vsel %vm712, 1, 0
        %v969 = vsel %vm713, 1, 0
        %v970 = vsel %vm714, 1, 0
        %v971 = vsel %vm715, 1, 0
        %v972 = vsel %vm716, 1, 0
        %v973 = vsel %vm717, 1, 0
        %v974 = vsel %vm718, 1, 0
        %v975 = vsel %vm719, 1, 0
        %v976 = vsel %vm720, 1, 0
        %v977 = vsel %vm721, 1, 0
        %v978 = vsel %vm722, 1, 0
        %v979 = vsel %vm723, 1, 0
        %v980 = vsel %vm724, 1, 0
        %v981 = vsel %vm725, 1, 0
        %v982 = vsel %vm726, 1, 0
        %v983 = vsel %vm727, 1, 0
        %v984 = vsel %vm728, 1, 0
        %v985 = vsel %vm729, 1, 0
        %v986 = vsel %vm730, 1, 0
        %v987 = vsel %vm731, 1, 0
        %v988 = vsel %vm732, 1, 0
        %v989 = vsel %vm733, 1, 0
        %v990 = vsel %vm734, 1, 0
        %v991 = vsel %vm735, 1, 0
        %v992 = vsel %vm736, 1, 0
        %v993 = vsel %vm737, 1, 0
        %v994 = vsel %vm738, 1, 0
        %v995 = vsel %vm739, 1, 0
        %v996 = vsel %vm740, 1, 0
        %v997 = vsel %vm741, 1, 0
        %v998 = vsel %vm742, 1, 0
        %v999 = vsel %vm743, 1, 0
        %v1000 = vsel %vm744, 1, 0
        %v1001 = vsel %vm745, 1, 0
        %v1002 = vsel %vm746, 1, 0
        %v1003 = vsel %vm747, 1, 0
        %v1004 = vsel %vm748, 1, 0
        %v1005 = vsel %vm749, 1, 0
        %v1006 = vsel %vm750, 1, 0
        %v1007 = vsel %vm751, 1, 0
        %v1008 = vsel %vm752, 1, 0
        %v1009 = vsel %vm753, 1, 0
        %v1010 = vsel %vm754, 1, 0
        %v1011 = vsel %vm755, 1, 0
        %v1012 = vsel %vm756, 1, 0
        %v1013 = vsel %vm757, 1, 0
        %v1014 = vsel %vm758, 1, 0
        %v1015 = vsel %vm759, 1, 0
        %v1016 = vsel %vm760, 1, 0
        %v1017 = vsel %vm761, 1, 0
        %v1018 = vsel %vm762, 1, 0
        %v1019 = vsel %vm763, 1, 0
        %v1020 = vsel %vm764, 1, 0
        %v1021 = vsel %vm765, 1, 0
        %v1022 = vsel %vm766, 1, 0
        %v1023 = vsel %vm767, 1, 0
        %v1024 = vsel %vm768, 1, 0
        %v1025 = vsel %vm769, 1, 0
        %v1026 = vsel %vm770, 1, 0
        %v1027 = vsel %vm771, 1, 0
        %v1028 = vsel %vm772, 1, 0
        %v1029 = vsel %vm773, 1, 0
        %v1030 = vsel %vm774, 1, 0
        %v1031 = vsel %vm775, 1, 0
        %v1032 = vsel %vm776, 1, 0
        %v1033 = vsel %vm777, 1, 0
        %v1034 = vsel %vm778, 1, 0
        %v1035 = vsel %vm779, 1, 0
        %v1036 = vsel %vm780, 1, 0
        %v1037 = vsel %vm781, 1, 0
        %v1038 = vsel %vm782, 1, 0
        %v1039 = vsel %vm783, 1, 0
        %v1040 = vsel %vm784, 1, 0
        %v1041 = vsel %vm785, 1, 0
        %v1042 = vsel %vm786, 1, 0
        %v1043 = vsel %vm787, 1, 0
        %v1044 = vsel %vm788, 1, 0
        %v1045 = vsel %vm789, 1, 0
        %v1046 = vsel %vm790, 1, 0
        %v1047 = vsel %vm791, 1, 0
        %v1048 = vsel %vm792, 1, 0
        %v1049 = vsel %vm793, 1, 0
        %v1050 = vsel %vm794, 1, 0
        %v1051 = vsel %vm795, 1, 0
        %v1052 = vsel %vm796, 1, 0
        %v1053 = vsel %vm797, 1, 0
        %v1054 = vsel %vm798, 1, 0
        %v1055 = vsel %vm799, 1, 0
        %v1056 = vsel %vm800, 1, 0
        %v1057 = vsel %vm801, 1, 0
        %v1058 = vsel %vm802, 1, 0
        %v1059 = vsel %vm803, 1, 0
        %v1060 = vsel %vm804, 1, 0
        %v1061 = vsel %vm805, 1, 0
        %v1062 = vsel %vm806, 1, 0
        %v1063 = vsel %vm807, 1, 0
        %v1064 = vsel %vm808, 1, 0
        %v1065 = vsel %vm809, 1, 0
        %v1066 = vsel %vm810, 1, 0
        %v1067 = vsel %vm811, 1, 0
        %v1068 = vsel %vm812, 1, 0
        %v1069 = vsel %vm813, 1, 0
        %v1070 = vsel %vm814, 1, 0
        %v1071 = vsel %vm815, 1, 0
        %v1072 = vsel %vm816, 1, 0
        %v1073 = vsel %vm817, 1, 0
        %v1074 = vsel %vm818, 1, 0
        %v1075 = vsel %vm819, 1, 0
        %v1076 = vsel %vm820, 1, 0
        %v1077 = vsel %vm821, 1, 0
        %v1078 = vsel %vm822, 1, 0
        %v1079 = vsel %vm823, 1, 0
        %v1080 = vsel %vm824, 1, 0
        %v1081 = vsel %vm825, 1, 0
        %v1082 = vsel %vm826, 1, 0
        %v1083 = vsel %vm827, 1, 0
        %v1084 = vsel %vm828, 1, 0
        %v1085 = vsel %vm829, 1, 0
        %v1086 = vsel %vm830, 1, 0
        %v1087 = vsel %vm831, 1, 0
        %v1088 = vsel %vm832, 1, 0
        %v1089 = vsel %vm833, 1, 0
        %v1090 = vsel %vm834, 1, 0
        %v1091 = vsel %vm835, 1, 0
        %v1092 = vsel %vm836, 1, 0
        %v1093 = vsel %vm837, 1, 0
        %v1094 = vsel %vm838, 1, 0
        %v1095 = vsel %vm839, 1, 0
        %v1096 = vsel %vm840, 1, 0
        %v1097 = vsel %vm841, 1, 0
        %v1098 = vsel %vm842, 1, 0
        %v1099 = vsel %vm843, 1, 0
        %v1100 = vsel %vm844, 1, 0
        %v1101 = vsel %vm845, 1, 0
        %v1102 = vsel %vm846, 1, 0
        %v1103 = vsel %vm847, 1, 0
        %v1104 = vsel %vm848, 1, 0
        %v1105 = vsel %vm849, 1, 0
        %v1106 = vsel %vm850, 1, 0
        %v1107 = vsel %vm851, 1, 0
        %v1108 = vsel %vm852, 1, 0
        %v1109 = vsel %vm853, 1, 0
        %v1110 = vsel %vm854, 1, 0
        %v1111 = vsel %vm855, 1, 0
        %v1112 = vsel %vm856, 1, 0
        %v1113 = vsel %vm857, 1, 0
        %v1114 = vsel %vm858, 1, 0
        %v1115 = vsel %vm859, 1, 0
        %v1116 = vsel %vm860, 1, 0
        %v1117 = vsel %vm861, 1, 0
        %v1118 = vsel %vm862, 1, 0
        %v1119 = vsel %vm863, 1, 0
        %v1120 = vsel %vm864, 1, 0
        %v1121 = vsel %vm865, 1, 0
        %v1122 = vsel %vm866, 1, 0
        %v1123 = vsel %vm867, 1, 0
        %v1124 = vsel %vm868, 1, 0
        %v1125 = vsel %vm869, 1, 0
        %v1126 = vcvt.s32.f32 %v870
        %v1127 = vcvt.s32.f32 %v871
        %v1128 = vcvt.s32.f32 %v872
        %v1129 = vcvt.s32.f32 %v873
        %v1130 = vcvt.s32.f32 %v874
        %v1131 = vcvt.s32.f32 %v875
        %v1132 = vcvt.s32.f32 %v876
        %v1133 = vcvt.s32.f32 %v877
        %v1134 = vcvt.s32.f32 %v878
        %v1135 = vcvt.s32.f32 %v879
        %v1136 = vcvt.s32.f32 %v880
        %v1137 = vcvt.s32.f32 %v881
        %v1138 = vcvt.s32.f32 %v882
        %v1139 = vcvt.s32.f32 %v883
        %v1140 = vcvt.s32.f32 %v884
        %v1141 = vcvt.s32.f32 %v885
        %v1142 = vcvt.s32.f32 %v886
        %v1143 = vcvt.s32.f32 %v887
        %v1144 = vcvt.s32.f32 %v888
        %v1145 = vcvt.s32.f32 %v889
        %v1146 = vcvt.s32.f32 %v890
        %v1147 = vcvt.s32.f32 %v891
        %v1148 = vcvt.s32.f32 %v892
        %v1149 = vcvt.s32.f32 %v893
        %v1150 = vcvt.s32.f32 %v894
        %v1151 = vcvt.s32.f32 %v895
        %v1152 = vcvt.s32.f32 %v896
        %v1153 = vcvt.s32.f32 %v897
        %v1154 = vcvt.s32.f32 %v898
        %v1155 = vcvt.s32.f32 %v899
        %v1156 = vcvt.s32.f32 %v900
        %v1157 = vcvt.s32.f32 %v901
        %v1158 = vcvt.s32.f32 %v902
        %v1159 = vcvt.s32.f32 %v903
        %v1160 = vcvt.s32.f32 %v904
        %v1161 = vcvt.s32.f32 %v905
        %v1162 = vcvt.s32.f32 %v906
        %v1163 = vcvt.s32.f32 %v907
        %v1164 = vcvt.s32.f32 %v908
        %v1165 = vcvt.s32.f32 %v909
        %v1166 = vcvt.s32.f32 %v910
        %v1167 = vcvt.s32.f32 %v911
        %v1168 = vcvt.s32.f32 %v912
        %v1169 = vcvt.s32.f32 %v913
        %v1170 = vcvt.s32.f32 %v914
        %v1171 = vcvt.s32.f32 %v915
        %v1172 = vcvt.s32.f32 %v916
        %v1173 = vcvt.s32.f32 %v917
        %v1174 = vcvt.s32.f32 %v918
        %v1175 = vcvt.s32.f32 %v919
        %v1176 = vcvt.s32.f32 %v920
        %v1177 = vcvt.s32.f32 %v921
        %v1178 = vcvt.s32.f32 %v922
        %v1179 = vcvt.s32.f32 %v923
        %v1180 = vcvt.s32.f32 %v924
        %v1181 = vcvt.s32.f32 %v925
        %v1182 = vcvt.s32.f32 %v926
        %v1183 = vcvt.s32.f32 %v927
        %v1184 = vcvt.s32.f32 %v928
        %v1185 = vcvt.s32.f32 %v929
        %v1186 = vcvt.s32.f32 %v930
        %v1187 = vcvt.s32.f32 %v931
        %v1188 = vcvt.s32.f32 %v932
        %v1189 = vcvt.s32.f32 %v933
        %v1190 = vcvt.s32.f32 %v934
        %v1191 = vcvt.s32.f32 %v935
        %v1192 = vcvt.s32.f32 %v936
        %v1193 = vcvt.s32.f32 %v937
        %v1194 = vcvt.s32.f32 %v938
        %v1195 = vcvt.s32.f32 %v939
        %v1196 = vcvt.s32.f32 %v940
        %v1197 = vcvt.s32.f32 %v941
        %v1198 = vcvt.s32.f32 %v942
        %v1199 = vcvt.s32.f32 %v943
        %v1200 = vcvt.s32.f32 %v944
        %v1201 = vcvt.s32.f32 %v945
        %v1202 = vcvt.s32.f32 %v946
        %v1203 = vcvt.s32.f32 %v947
        %v1204 = vcvt.s32.f32 %v948
        %v1205 = vcvt.s32.f32 %v949
        %v1206 = vcvt.s32.f32 %v950
        %v1207 = vcvt.s32.f32 %v951
        %v1208 = vcvt.s32.f32 %v952
        %v1209 = vcvt.s32.f32 %v953
        %v1210 = vcvt.s32.f32 %v954
        %v1211 = vcvt.s32.f32 %v955
        %v1212 = vcvt.s32.f32 %v956
        %v1213 = vcvt.s32.f32 %v957
        %v1214 = vcvt.s32.f32 %v958
        %v1215 = vcvt.s32.f32 %v959
        %v1216 = vcvt.s32.f32 %v960
        %v1217 = vcvt.s32.f32 %v961
        %v1218 = vcvt.s32.f32 %v962
        %v1219 = vcvt.s32.f32 %v963
        %v1220 = vcvt.s32.f32 %v964
        %v1221 = vcvt.s32.f32 %v965
        %v1222 = vcvt.s32.f32 %v966
        %v1223 = vcvt.s32.f32 %v967
        %v1224 = vcvt.s32.f32 %v968
        %v1225 = vcvt.s32.f32 %v969
        %v1226 = vcvt.s32.f32 %v970
        %v1227 = vcvt.s32.f32 %v971
        %v1228 = vcvt.s32.f32 %v972
        %v1229 = vcvt.s32.f32 %v973
        %v1230 = vcvt.s32.f32 %v974
        %v1231 = vcvt.s32.f32 %v975
        %v1232 = vcvt.s32.f32 %v976
        %v1233 = vcvt.s32.f32 %v977
        %v1234 = vcvt.s32.f32 %v978
        %v1235 = vcvt.s32.f32 %v979
        %v1236 = vcvt.s32.f32 %v980
        %v1237 = vcvt.s32.f32 %v981
        %v1238 = vcvt.s32.f32 %v982
        %v1239 = vcvt.s32.f32 %v983
        %v1240 = vcvt.s32.f32 %v984
        %v1241 = vcvt.s32.f32 %v985
        %v1242 = vcvt.s32.f32 %v986
        %v1243 = vcvt.s32.f32 %v987
        %v1244 = vcvt.s32.f32 %v988
        %v1245 = vcvt.s32.f32 %v989
        %v1246 = vcvt.s32.f32 %v990
        %v1247 = vcvt.s32.f32 %v991
        %v1248 = vcvt.s32.f32 %v992
        %v1249 = vcvt.s32.f32 %v993
        %v1250 = vcvt.s32.f32 %v994
        %v1251 = vcvt.s32.f32 %v995
        %v1252 = vcvt.s32.f32 %v996
        %v1253 = vcvt.s32.f32 %v997
        %v1254 = vcvt.s32.f32 %v998
        %v1255 = vcvt.s32.f32 %v999
        %v1256 = vcvt.s32.f32 %v1000
        %v1257 = vcvt.s32.f32 %v1001
        %v1258 = vcvt.s32.f32 %v1002
        %v1259 = vcvt.s32.f32 %v1003
        %v1260 = vcvt.s32.f32 %v1004
        %v1261 = vcvt.s32.f32 %v1005
        %v1262 = vcvt.s32.f32 %v1006
        %v1263 = vcvt.s32.f32 %v1007
        %v1264 = vcvt.s32.f32 %v1008
        %v1265 = vcvt.s32.f32 %v1009
        %v1266 = vcvt.s32.f32 %v1010
        %v1267 = vcvt.s32.f32 %v1011
        %v1268 = vcvt.s32.f32 %v1012
        %v1269 = vcvt.s32.f32 %v1013
        %v1270 = vcvt.s32.f32 %v1014
        %v1271 = vcvt.s32.f32 %v1015
        %v1272 = vcvt.s32.f32 %v1016
        %v1273 = vcvt.s32.f32 %v1017
        %v1274 = vcvt.s32.f32 %v1018
        %v1275 = vcvt.s32.f32 %v1019
        %v1276 = vcvt.s32.f32 %v1020
        %v1277 = vcvt.s32.f32 %v1021
        %v1278 = vcvt.s32.f32 %v1022
        %v1279 = vcvt.s32.f32 %v1023
        %v1280 = vcvt.s32.f32 %v1024
        %v1281 = vcvt.s32.f32 %v1025
        %v1282 = vcvt.s32.f32 %v1026
        %v1283 = vcvt.s32.f32 %v1027
        %v1284 = vcvt.s32.f32 %v1028
        %v1285 = vcvt.s32.f32 %v1029
        %v1286 = vcvt.s32.f32 %v1030
        %v1287 = vcvt.s32.f32 %v1031
        %v1288 = vcvt.s32.f32 %v1032
        %v1289 = vcvt.s32.f32 %v1033
        %v1290 = vcvt.s32.f32 %v1034
        %v1291 = vcvt.s32.f32 %v1035
        %v1292 = vcvt.s32.f32 %v1036
        %v1293 = vcvt.s32.f32 %v1037
        %v1294 = vcvt.s32.f32 %v1038
        %v1295 = vcvt.s32.f32 %v1039
        %v1296 = vcvt.s32.f32 %v1040
        %v1297 = vcvt.s32.f32 %v1041
        %v1298 = vcvt.s32.f32 %v1042
        %v1299 = vcvt.s32.f32 %v1043
        %v1300 = vcvt.s32.f32 %v1044
        %v1301 = vcvt.s32.f32 %v1045
        %v1302 = vcvt.s32.f32 %v1046
        %v1303 = vcvt.s32.f32 %v1047
        %v1304 = vcvt.s32.f32 %v1048
        %v1305 = vcvt.s32.f32 %v1049
        %v1306 = vcvt.s32.f32 %v1050
        %v1307 = vcvt.s32.f32 %v1051
        %v1308 = vcvt.s32.f32 %v1052
        %v1309 = vcvt.s32.f32 %v1053
        %v1310 = vcvt.s32.f32 %v1054
        %v1311 = vcvt.s32.f32 %v1055
        %v1312 = vcvt.s32.f32 %v1056
        %v1313 = vcvt.s32.f32 %v1057
        %v1314 = vcvt.s32.f32 %v1058
        %v1315 = vcvt.s32.f32 %v1059
        %v1316 = vcvt.s32.f32 %v1060
        %v1317 = vcvt.s32.f32 %v1061
        %v1318 = vcvt.s32.f32 %v1062
        %v1319 = vcvt.s32.f32 %v1063
        %v1320 = vcvt.s32.f32 %v1064
        %v1321 = vcvt.s32.f32 %v1065
        %v1322 = vcvt.s32.f32 %v1066
        %v1323 = vcvt.s32.f32 %v1067
        %v1324 = vcvt.s32.f32 %v1068
        %v1325 = vcvt.s32.f32 %v1069
        %v1326 = vcvt.s32.f32 %v1070
        %v1327 = vcvt.s32.f32 %v1071
        %v1328 = vcvt.s32.f32 %v1072
        %v1329 = vcvt.s32.f32 %v1073
        %v1330 = vcvt.s32.f32 %v1074
        %v1331 = vcvt.s32.f32 %v1075
        %v1332 = vcvt.s32.f32 %v1076
        %v1333 = vcvt.s32.f32 %v1077
        %v1334 = vcvt.s32.f32 %v1078
        %v1335 = vcvt.s32.f32 %v1079
        %v1336 = vcvt.s32.f32 %v1080
        %v1337 = vcvt.s32.f32 %v1081
        %v1338 = vcvt.s32.f32 %v1082
        %v1339 = vcvt.s32.f32 %v1083
        %v1340 = vcvt.s32.f32 %v1084
        %v1341 = vcvt.s32.f32 %v1085
        %v1342 = vcvt.s32.f32 %v1086
        %v1343 = vcvt.s32.f32 %v1087
        %v1344 = vcvt.s32.f32 %v1088
        %v1345 = vcvt.s32.f32 %v1089
        %v1346 = vcvt.s32.f32 %v1090
        %v1347 = vcvt.s32.f32 %v1091
        %v1348 = vcvt.s32.f32 %v1092
        %v1349 = vcvt.s32.f32 %v1093
        %v1350 = vcvt.s32.f32 %v1094
        %v1351 = vcvt.s32.f32 %v1095
        %v1352 = vcvt.s32.f32 %v1096
        %v1353 = vcvt.s32.f32 %v1097
        %v1354 = vcvt.s32.f32 %v1098
        %v1355 = vcvt.s32.f32 %v1099
        %v1356 = vcvt.s32.f32 %v1100
        %v1357 = vcvt.s32.f32 %v1101
        %v1358 = vcvt.s32.f32 %v1102
        %v1359 = vcvt.s32.f32 %v1103
        %v1360 = vcvt.s32.f32 %v1104
        %v1361 = vcvt.s32.f32 %v1105
        %v1362 = vcvt.s32.f32 %v1106
        %v1363 = vcvt.s32.f32 %v1107
        %v1364 = vcvt.s32.f32 %v1108
        %v1365 = vcvt.s32.f32 %v1109
        %v1366 = vcvt.s32.f32 %v1110
        %v1367 = vcvt.s32.f32 %v1111
        %v1368 = vcvt.s32.f32 %v1112
        %v1369 = vcvt.s32.f32 %v1113
        %v1370 = vcvt.s32.f32 %v1114
        %v1371 = vcvt.s32.f32 %v1115
        %v1372 = vcvt.s32.f32 %v1116
        %v1373 = vcvt.s32.f32 %v1117
        %v1374 = vcvt.s32.f32 %v1118
        %v1375 = vcvt.s32.f32 %v1119
        %v1376 = vcvt.s32.f32 %v1120
        %v1377 = vcvt.s32.f32 %v1121
        %v1378 = vcvt.s32.f32 %v1122
        %v1379 = vcvt.s32.f32 %v1123
        %v1380 = vcvt.s32.f32 %v1124
        %v1381 = vcvt.s32.f32 %v1125
        %v1382 = vld [vmem:[#allocation2] sm:$0xff]
        %v1383 = vld [vmem:[#allocation2 + $0x8] sm:$0xff]
        %1384 = vmatprep.subr.mxu0 %v1247
        %1385 = vmatpush1.xpose.msra.mxu0 %v1246
        %1386 = vmatprep.subr.mxu0 %v1239
        %1387 = vmatpush1.xpose.msra.mxu0 %v1238
        %1388 = vmatprep.subr.mxu0 %v1231
        %1389 = vmatpush1.xpose.msra.mxu0 %v1230
        %1390 = vmatprep.subr.mxu0 %v1223
        %1391 = vmatpush1.xpose.msra.mxu0 %v1222
        %1392 = vmatprep.subr.mxu0 %v1215
        %1393 = vmatpush1.xpose.msra.mxu0 %v1214
        %1394 = vmatprep.subr.mxu0 %v1207
        %1395 = vmatpush1.xpose.msra.mxu0 %v1206
        %1396 = vmatprep.subr.mxu0 %v1199
        %1397 = vmatpush1.xpose.msra.mxu0 %v1198
        %1398 = vmatprep.subr.mxu0 %v1191
        %1399 = vmatpush1.xpose.msra.mxu0 %v1190
        %1400 = vmatprep.subr.mxu0 %v1183
        %1401 = vmatpush1.xpose.msra.mxu0 %v1182
        %1402 = vmatprep.subr.mxu0 %v1175
        %1403 = vmatpush1.xpose.msra.mxu0 %v1174
        %1404 = vmatprep.subr.mxu0 %v1167
        %1405 = vmatpush1.xpose.msra.mxu0 %v1166
        %1406 = vmatprep.subr.mxu0 %v1159
        %1407 = vmatpush1.xpose.msra.mxu0 %v1158
        %1408 = vmatprep.subr.mxu0 %v1151
        %1409 = vmatpush1.xpose.msra.mxu0 %v1150
        %1410 = vmatprep.subr.mxu0 %v1143
        %1411 = vmatpush1.xpose.msra.mxu0 %v1142
        %1412 = vmatprep.subr.mxu0 %v1135
        %1413 = vmatpush1.xpose.msra.mxu0 %v1134
        %1414 = vmatprep.subr.mxu0 %v1127
        %1415 = vmatpush1.xpose.msra.mxu0 %v1126
        %1416 = vmatprep.subr.mxu0 %v1375
        %1417 = vmatpush2.xpose.msra.mxu0 %v1374
        %1418 = vmatprep.subr.mxu0 %v1367
        %1419 = vmatpush2.xpose.msra.mxu0 %v1366
        %1420 = vmatprep.subr.mxu0 %v1359
        %1421 = vmatpush2.xpose.msra.mxu0 %v1358
        %1422 = vmatprep.subr.mxu0 %v1351
        %1423 = vmatpush2.xpose.msra.mxu0 %v1350
        %1424 = vmatprep.subr.mxu0 %v1343
        %1425 = vmatpush2.xpose.msra.mxu0 %v1342
        %1426 = vmatprep.subr.mxu0 %v1335
        %1427 = vmatpush2.xpose.msra.mxu0 %v1334
        %1428 = vmatprep.subr.mxu0 %v1327
        %1429 = vmatpush2.xpose.msra.mxu0 %v1326
        %1430 = vmatprep.subr.mxu0 %v1319
        %1431 = vmatpush2.xpose.msra.mxu0 %v1318
        %1432 = vmatprep.subr.mxu0 %v1311
        %1433 = vmatpush2.xpose.msra.mxu0 %v1310
        %1434 = vmatprep.subr.mxu0 %v1303
        %1435 = vmatpush2.xpose.msra.mxu0 %v1302
        %1436 = vmatprep.subr.mxu0 %v1295
        %1437 = vmatpush2.xpose.msra.mxu0 %v1294
        %1438 = vmatprep.subr.mxu0 %v1287
        %1439 = vmatpush2.xpose.msra.mxu0 %v1286
        %1440 = vmatprep.subr.mxu0 %v1279
        %1441 = vmatpush2.xpose.msra.mxu0 %v1278
        %1442 = vmatprep.subr.mxu0 %v1271
        %1443 = vmatpush2.xpose.msra.mxu0 %v1270
        %1444 = vmatprep.subr.mxu0 %v1263
        %1445 = vmatpush2.xpose.msra.mxu0 %v1262
        %1446 = vmatprep.subr.mxu0 %v1255
        %1447 = vmatpush2.xpose.msra.mxu0 %v1254
        %1448 = vmatprep.mubr.f32.mxu0 %v376
        %1449 = vmatmul.mubr.f32.gmra.mxu0 %v375
        %v1450 = vpop.f32.mrf.mxu0
        %v1451 = vadd.f32 0.0, %v1450
        %v1452 = vpop.f32.mrf.mxu0
        %v1453 = vadd.f32 0.0, %v1452
        %1454 = vdwg.mxu0
        %1455 = vmatprep.subr.mxu0 %v1249
        %1456 = vmatpush1.xpose.msra.mxu0 %v1248
        %1457 = vmatprep.subr.mxu0 %v1241
        %1458 = vmatpush1.xpose.msra.mxu0 %v1240
        %1459 = vmatprep.subr.mxu0 %v1233
        %1460 = vmatpush1.xpose.msra.mxu0 %v1232
        %1461 = vmatprep.subr.mxu0 %v1225
        %1462 = vmatpush1.xpose.msra.mxu0 %v1224
        %1463 = vmatprep.subr.mxu0 %v1217
        %1464 = vmatpush1.xpose.msra.mxu0 %v1216
        %1465 = vmatprep.subr.mxu0 %v1209
        %1466 = vmatpush1.xpose.msra.mxu0 %v1208
        %1467 = vmatprep.subr.mxu0 %v1201
        %1468 = vmatpush1.xpose.msra.mxu0 %v1200
        %1469 = vmatprep.subr.mxu0 %v1193
        %1470 = vmatpush1.xpose.msra.mxu0 %v1192
        %1471 = vmatprep.subr.mxu0 %v1185
        %1472 = vmatpush1.xpose.msra.mxu0 %v1184
        %1473 = vmatprep.subr.mxu0 %v1177
        %1474 = vmatpush1.xpose.msra.mxu0 %v1176
        %1475 = vmatprep.subr.mxu0 %v1169
        %1476 = vmatpush1.xpose.msra.mxu0 %v1168
        %1477 = vmatprep.subr.mxu0 %v1161
        %1478 = vmatpush1.xpose.msra.mxu0 %v1160
        %1479 = vmatprep.subr.mxu0 %v1153
        %1480 = vmatpush1.xpose.msra.mxu0 %v1152
        %1481 = vmatprep.subr.mxu0 %v1145
        %1482 = vmatpush1.xpose.msra.mxu0 %v1144
        %1483 = vmatprep.subr.mxu0 %v1137
        %1484 = vmatpush1.xpose.msra.mxu0 %v1136
        %1485 = vmatprep.subr.mxu0 %v1129
        %1486 = vmatpush1.xpose.msra.mxu0 %v1128
        %1487 = vmatprep.subr.mxu0 %v1377
        %1488 = vmatpush2.xpose.msra.mxu0 %v1376
        %1489 = vmatprep.subr.mxu0 %v1369
        %1490 = vmatpush2.xpose.msra.mxu0 %v1368
        %1491 = vmatprep.subr.mxu0 %v1361
        %1492 = vmatpush2.xpose.msra.mxu0 %v1360
        %1493 = vmatprep.subr.mxu0 %v1353
        %1494 = vmatpush2.xpose.msra.mxu0 %v1352
        %1495 = vmatprep.subr.mxu0 %v1345
        %1496 = vmatpush2.xpose.msra.mxu0 %v1344
        %1497 = vmatprep.subr.mxu0 %v1337
        %1498 = vmatpush2.xpose.msra.mxu0 %v1336
        %1499 = vmatprep.subr.mxu0 %v1329
        %1500 = vmatpush2.xpose.msra.mxu0 %v1328
        %1501 = vmatprep.subr.mxu0 %v1321
        %1502 = vmatpush2.xpose.msra.mxu0 %v1320
        %1503 = vmatprep.subr.mxu0 %v1313
        %1504 = vmatpush2.xpose.msra.mxu0 %v1312
        %1505 = vmatprep.subr.mxu0 %v1305
        %1506 = vmatpush2.xpose.msra.mxu0 %v1304
        %1507 = vmatprep.subr.mxu0 %v1297
        %1508 = vmatpush2.xpose.msra.mxu0 %v1296
        %1509 = vmatprep.subr.mxu0 %v1289
        %1510 = vmatpush2.xpose.msra.mxu0 %v1288
        %1511 = vmatprep.subr.mxu0 %v1281
        %1512 = vmatpush2.xpose.msra.mxu0 %v1280
        %1513 = vmatprep.subr.mxu0 %v1273
        %1514 = vmatpush2.xpose.msra.mxu0 %v1272
        %1515 = vmatprep.subr.mxu0 %v1265
        %1516 = vmatpush2.xpose.msra.mxu0 %v1264
        %1517 = vmatprep.subr.mxu0 %v1257
        %1518 = vmatpush2.xpose.msra.mxu0 %v1256
        %1519 = vmatprep.mubr.f32.mxu0 %v413
        %1520 = vmatmul.mubr.f32.gmra.mxu0 %v412
        %v1521 = vpop.f32.mrf.mxu0
        %v1522 = vadd.f32 %v1451, %v1521
        %v1523 = vpop.f32.mrf.mxu0
        %v1524 = vadd.f32 %v1453, %v1523
        %1525 = vdwg.mxu0
        %1526 = vmatprep.subr.mxu0 %v1251
        %1527 = vmatpush1.xpose.msra.mxu0 %v1250
        %1528 = vmatprep.subr.mxu0 %v1243
        %1529 = vmatpush1.xpose.msra.mxu0 %v1242
        %1530 = vmatprep.subr.mxu0 %v1235
        %1531 = vmatpush1.xpose.msra.mxu0 %v1234
        %1532 = vmatprep.subr.mxu0 %v1227
        %1533 = vmatpush1.xpose.msra.mxu0 %v1226
        %1534 = vmatprep.subr.mxu0 %v1219
        %1535 = vmatpush1.xpose.msra.mxu0 %v1218
        %1536 = vmatprep.subr.mxu0 %v1211
        %1537 = vmatpush1.xpose.msra.mxu0 %v1210
        %1538 = vmatprep.subr.mxu0 %v1203
        %1539 = vmatpush1.xpose.msra.mxu0 %v1202
        %1540 = vmatprep.subr.mxu0 %v1195
        %1541 = vmatpush1.xpose.msra.mxu0 %v1194
        %1542 = vmatprep.subr.mxu0 %v1187
        %1543 = vmatpush1.xpose.msra.mxu0 %v1186
        %1544 = vmatprep.subr.mxu0 %v1179
        %1545 = vmatpush1.xpose.msra.mxu0 %v1178
        %1546 = vmatprep.subr.mxu0 %v1171
        %1547 = vmatpush1.xpose.msra.mxu0 %v1170
        %1548 = vmatprep.subr.mxu0 %v1163
        %1549 = vmatpush1.xpose.msra.mxu0 %v1162
        %1550 = vmatprep.subr.mxu0 %v1155
        %1551 = vmatpush1.xpose.msra.mxu0 %v1154
        %1552 = vmatprep.subr.mxu0 %v1147
        %1553 = vmatpush1.xpose.msra.mxu0 %v1146
        %1554 = vmatprep.subr.mxu0 %v1139
        %1555 = vmatpush1.xpose.msra.mxu0 %v1138
        %1556 = vmatprep.subr.mxu0 %v1131
        %1557 = vmatpush1.xpose.msra.mxu0 %v1130
        %1558 = vmatprep.subr.mxu0 %v1379
        %1559 = vmatpush2.xpose.msra.mxu0 %v1378
        %1560 = vmatprep.subr.mxu0 %v1371
        %1561 = vmatpush2.xpose.msra.mxu0 %v1370
        %1562 = vmatprep.subr.mxu0 %v1363
        %1563 = vmatpush2.xpose.msra.mxu0 %v1362
        %1564 = vmatprep.subr.mxu0 %v1355
        %1565 = vmatpush2.xpose.msra.mxu0 %v1354
        %1566 = vmatprep.subr.mxu0 %v1347
        %1567 = vmatpush2.xpose.msra.mxu0 %v1346
        %1568 = vmatprep.subr.mxu0 %v1339
        %1569 = vmatpush2.xpose.msra.mxu0 %v1338
        %1570 = vmatprep.subr.mxu0 %v1331
        %1571 = vmatpush2.xpose.msra.mxu0 %v1330
        %1572 = vmatprep.subr.mxu0 %v1323
        %1573 = vmatpush2.xpose.msra.mxu0 %v1322
        %1574 = vmatprep.subr.mxu0 %v1315
        %1575 = vmatpush2.xpose.msra.mxu0 %v1314
        %1576 = vmatprep.subr.mxu0 %v1307
        %1577 = vmatpush2.xpose.msra.mxu0 %v1306
        %1578 = vmatprep.subr.mxu0 %v1299
        %1579 = vmatpush2.xpose.msra.mxu0 %v1298
        %1580 = vmatprep.subr.mxu0 %v1291
        %1581 = vmatpush2.xpose.msra.mxu0 %v1290
        %1582 = vmatprep.subr.mxu0 %v1283
        %1583 = vmatpush2.xpose.msra.mxu0 %v1282
        %1584 = vmatprep.subr.mxu0 %v1275
        %1585 = vmatpush2.xpose.msra.mxu0 %v1274
        %1586 = vmatprep.subr.mxu0 %v1267
        %1587 = vmatpush2.xpose.msra.mxu0 %v1266
        %1588 = vmatprep.subr.mxu0 %v1259
        %1589 = vmatpush2.xpose.msra.mxu0 %v1258
        %1590 = vmatprep.mubr.f32.mxu0 %v452
        %1591 = vmatmul.mubr.f32.gmra.mxu0 %v451
        %v1592 = vpop.f32.mrf.mxu0
        %v1593 = vadd.f32 %v1522, %v1592
        %v1594 = vpop.f32.mrf.mxu0
        %v1595 = vadd.f32 %v1524, %v1594
        %1596 = vdwg.mxu0
        %1597 = vmatprep.subr.mxu0 %v1253
        %1598 = vmatpush1.xpose.msra.mxu0 %v1252
        %1599 = vmatprep.subr.mxu0 %v1245
        %1600 = vmatpush1.xpose.msra.mxu0 %v1244
        %1601 = vmatprep.subr.mxu0 %v1237
        %1602 = vmatpush1.xpose.msra.mxu0 %v1236
        %1603 = vmatprep.subr.mxu0 %v1229
        %1604 = vmatpush1.xpose.msra.mxu0 %v1228
        %1605 = vmatprep.subr.mxu0 %v1221
        %1606 = vmatpush1.xpose.msra.mxu0 %v1220
        %1607 = vmatprep.subr.mxu0 %v1213
        %1608 = vmatpush1.xpose.msra.mxu0 %v1212
        %1609 = vmatprep.subr.mxu0 %v1205
        %1610 = vmatpush1.xpose.msra.mxu0 %v1204
        %1611 = vmatprep.subr.mxu0 %v1197
        %1612 = vmatpush1.xpose.msra.mxu0 %v1196
        %1613 = vmatprep.subr.mxu0 %v1189
        %1614 = vmatpush1.xpose.msra.mxu0 %v1188
        %1615 = vmatprep.subr.mxu0 %v1181
        %1616 = vmatpush1.xpose.msra.mxu0 %v1180
        %1617 = vmatprep.subr.mxu0 %v1173
        %1618 = vmatpush1.xpose.msra.mxu0 %v1172
        %1619 = vmatprep.subr.mxu0 %v1165
        %1620 = vmatpush1.xpose.msra.mxu0 %v1164
        %1621 = vmatprep.subr.mxu0 %v1157
        %1622 = vmatpush1.xpose.msra.mxu0 %v1156
        %1623 = vmatprep.subr.mxu0 %v1149
        %1624 = vmatpush1.xpose.msra.mxu0 %v1148
        %1625 = vmatprep.subr.mxu0 %v1141
        %1626 = vmatpush1.xpose.msra.mxu0 %v1140
        %1627 = vmatprep.subr.mxu0 %v1133
        %1628 = vmatpush1.xpose.msra.mxu0 %v1132
        %1629 = vmatprep.subr.mxu0 %v1381
        %1630 = vmatpush2.xpose.msra.mxu0 %v1380
        %1631 = vmatprep.subr.mxu0 %v1373
        %1632 = vmatpush2.xpose.msra.mxu0 %v1372
        %1633 = vmatprep.subr.mxu0 %v1365
        %1634 = vmatpush2.xpose.msra.mxu0 %v1364
        %1635 = vmatprep.subr.mxu0 %v1357
        %1636 = vmatpush2.xpose.msra.mxu0 %v1356
        %1637 = vmatprep.subr.mxu0 %v1349
        %1638 = vmatpush2.xpose.msra.mxu0 %v1348
        %1639 = vmatprep.subr.mxu0 %v1341
        %1640 = vmatpush2.xpose.msra.mxu0 %v1340
        %1641 = vmatprep.subr.mxu0 %v1333
        %1642 = vmatpush2.xpose.msra.mxu0 %v1332
        %1643 = vmatprep.subr.mxu0 %v1325
        %1644 = vmatpush2.xpose.msra.mxu0 %v1324
        %1645 = vmatprep.subr.mxu0 %v1317
        %1646 = vmatpush2.xpose.msra.mxu0 %v1316
        %1647 = vmatprep.subr.mxu0 %v1309
        %1648 = vmatpush2.xpose.msra.mxu0 %v1308
        %1649 = vmatprep.subr.mxu0 %v1301
        %1650 = vmatpush2.xpose.msra.mxu0 %v1300
        %1651 = vmatprep.subr.mxu0 %v1293
        %1652 = vmatpush2.xpose.msra.mxu0 %v1292
        %1653 = vmatprep.subr.mxu0 %v1285
        %1654 = vmatpush2.xpose.msra.mxu0 %v1284
        %1655 = vmatprep.subr.mxu0 %v1277
        %1656 = vmatpush2.xpose.msra.mxu0 %v1276
        %1657 = vmatprep.subr.mxu0 %v1269
        %1658 = vmatpush2.xpose.msra.mxu0 %v1268
        %1659 = vmatprep.subr.mxu0 %v1261
        %1660 = vmatpush2.xpose.msra.mxu0 %v1260
        %1661 = vmatprep.mubr.f32.mxu0 %v482
        %1662 = vmatmul.mubr.f32.gmra.mxu0 %v481
        %v1663 = vpop.f32.mrf.mxu0
        %v1664 = vadd.f32 %v1593, %v1663
        %v1665 = vpop.f32.mrf.mxu0
        %v1666 = vadd.f32 %v1595, %v1665
        %1667 = vdwg.mxu0
        %v1668 = vadd.f32 %v1382, %v1664
        %v1669 = vadd.f32 %v1383, %v1666
        %1670 = vst [vmem:[#allocation2] sm:$0xff] %v1668
        %1671 = vst [vmem:[#allocation2 + $0x8] sm:$0xff] %v1669
        // Predicated region
        $region49: #{tpu_custom_call.1} parent=31 // pred_check
          %p1672 = pneg %p297
        $region50: #{tpu_custom_call.1} parent=31 // pred_check_branch
          %1674 = sbr.rel (%p1672) target = $region52
        $region51: #{tpu_custom_call.1} parent=31 // pred_region
          %v1675 = vld [vmem:[#allocation2] sm:$0xff]
          %v1676 = vld [vmem:[#allocation2 + $0x8] sm:$0xff]
          %vm1677 = vcmp.ne.f32.partialorder %v1675, 0.0
          %vm1678 = vcmp.ne.f32.partialorder %v1676, 0.0
          %v1679 = vsel %vm1677, %v1675, 1.0
          %v1680 = vsel %vm1678, %v1676, 1.0
          %v1681 = vrcp.pop %v1679
          %v1682 = vrcp.pop %v1680
          %v1685 = vrot.slane %v1681, 4
          %v1686 = vrot.slane %v1682, 4
          %v1689 = vmul.f32 %v1675, %v1685
          %v1690 = vmul.f32 %v1676, %v1686
          %v1693 = vrot.slane %v1689, 4
          %v1694 = vrot.slane %v1690, 4
          %v1697 = vsel %vm1677, %v1693, 0.0
          %v1698 = vsel %vm1678, %v1694, 0.0
          %v1701 = vcombine.high %v1697, %v1698
          %1703 = vst [vmem:[%s292] sm:$0xff] %v1701
        $region52: #{tpu_custom_call.1} parent=31 // pred_fallthru
          _
        %s1704 = sand.u32 %s136, 1
        %s1705 = scalar_lea.sflag [#allocation5], %s1704
        %s1706 = sand.u32 %s136, 1
        %s1707 = smul.addr %s1706, 8
        %s1708 = scalar_lea.vmem [#allocation9], %s1707
        // Predicated region
        $region53: #{tpu_custom_call.1} parent=31 // pred_check
          %p1709 = pneg %p146
        $region54: #{tpu_custom_call.1} parent=31 // pred_check_branch
          %1711 = sbr.rel (%p1709) target = $region56
        $region55: #{tpu_custom_call.1} parent=31 // pred_region
          %s1712 = smul.u32 2, %s29
          %s1714 = ssub.s32 128, 128
          %1715 = vsyncadd %s1705, %s1714
          %s1716 = smul.addr %s28, 2
          %s1717 = sadd.s32 %s1712, %s1716
          %s1718 = smul.addr %s1717, 64
          %s1719 = scalar_lea.hbm %s3, %s1718
          %s1721 = sshll.u32 %s1708, 4
          %s1722 = int_to_ptr.vmem [resolvable:$true] %s1721
          %1724 = dma.vmem_to_hbm [thread:$0]  %s1722, 128, %s1719, %s1705
        $region56: #{tpu_custom_call.1} parent=31 // pred_fallthru
          _
      $region32: #{tpu_custom_call.1} parent=5 // pred_fallthru
        _
      %p1725 = scmp.le.s32.totalorder 2, %s18
      // Predicated region
      $region57: #{tpu_custom_call.1} parent=5 // pred_check
        %p1726 = pneg %p1725
      $region58: #{tpu_custom_call.1} parent=5 // pred_check_branch
        %1728 = sbr.rel (%p1726) target = $region60
      $region59: #{tpu_custom_call.1} parent=5 // pred_region
        %s1729 = ssub.s32 %s18, 2
        // Predicated region
        $region61: #{tpu_custom_call.1} parent=59 // pred_check
          %p1730 = pneg %p152
        $region62: #{tpu_custom_call.1} parent=59 // pred_check_branch
          %1732 = sbr.rel (%p1730) target = $region64
        $region63: #{tpu_custom_call.1} parent=59 // pred_region
          %s1733 = sand.u32 %s137, 1
          %s1734 = scalar_lea.sflag [#allocation5], %s1733
          %s1735 = sand.u32 %s137, 1
          %s1736 = smul.addr %s1735, 8
          %s1737 = scalar_lea.vmem [#allocation9], %s1736
          %1738 = dma.done %s1734, 128
        $region64: #{tpu_custom_call.1} parent=59 // pred_fallthru
          _
      $region60: #{tpu_custom_call.1} parent=5 // pred_fallthru
        _
    $region6: #{tpu_custom_call.1} parent=1 // loop_footer
      %s22 = sadd.s32 1, %s18
    $region7: #{tpu_custom_call.1} parent=1 // loop_footer_branch
      %17 = sbr.rel target = $region3
    $region8: #{tpu_custom_call.1} parent=1 // loop_exit
      _
    %1739 = vsyncpa [#allocation4], 1
    %s1740 = scalar_lea.sflag [#allocation4], 1
    %1741 = vsyncpa %s1740, 1
    %1742 = vsyncpa [#allocation7], 1
    %s1743 = scalar_lea.sflag [#allocation7], 1
    %1744 = vsyncpa %s1743, 1
    %1745 = vsyncpa [#allocation5], 1
    %s1746 = scalar_lea.sflag [#allocation5], 1
    %1747 = vsyncpa %s1746, 1

</llo_original>
